<compile_context>
chip_gen: v7x
topology: tpu7x:2x2x1
jax: 0.10.0
libtpu: 0.0.40
codegen_flags: <defaults>
</compile_context>

<pallas_src>
import math

import jax
import jax.numpy as jnp
from jax.experimental import pallas as pl
from jax.experimental.pallas import tpu as pltpu


def _round_up(x, m):
    return (x + m - 1) // m * m


def _block_diag(mat, g):
    """(a, b) -> (g*a, g*b) block-diagonal with `mat` repeated on the diagonal."""
    if g == 1:
        return mat
    a, b = mat.shape
    eye = jnp.eye(g, dtype=mat.dtype)
    out = eye[:, None, :, None] * mat[None, :, None, :]      # (g, a, g, b)
    return out.reshape(g * a, g * b)


def lru_kernel(u_ref, lampow_ref, wb_ref, wcr_ref, wci_ref, wd_ref, y_ref,
               str_scr, sti_scr, xr_scr, xi_scr):
    """One (batch_tile, time_chunk) block of the LRU forward pass.

    u_ref      : (TC, TBS, G*IN)   inputs, time-major, G batch groups in lanes
    lampow_ref : (TC, TBS, 2*G*N)  [Re(lam^(t+1)) | Im(lam^(t+1))], G-tiled and
                                   pre-broadcast over the TBS sublanes
    wb_ref     : (G*IN, 2*G*N)     block-diag [B_re^T | B_im^T]
    wcr_ref    : (G*N, G*OUT)      block-diag C_re^T
    wci_ref    : (G*N, G*OUT)      block-diag -C_im^T
    wd_ref     : (G*IN, G*OUT)     block-diag D^T
    y_ref      : (TC, TBS, G*OUT)
    str_scr, sti_scr : (TC, TBS, G*N) per-chunk states (real / imag)
    xr_scr, xi_scr   : (TBS, G*N)     recurrent state carried across chunks
    """
    t_idx = pl.program_id(1)
    TC, TBS, GIN = u_ref.shape
    GN = xr_scr.shape[1]
    R = TC * TBS

    u2d = u_ref[...].reshape(R, GIN)

    # Fused input projection (block-diagonal over the G lane-packed batch
    # groups): one MXU matmul produces [Bu_re | Bu_im] already lane-packed.
    bu = jnp.dot(u2d, wb_ref[...], preferred_element_type=jnp.float32)
    # Feed-through path u @ D^T, computed up front (MXU is idle during the
    # scan); no staging of u into a concat scratch.
    y_d = jnp.dot(u2d, wd_ref[...], preferred_element_type=jnp.float32)

    str_scr[...] = bu[:, 0:GN].reshape(TC, TBS, GN)
    sti_scr[...] = bu[:, GN:2 * GN].reshape(TC, TBS, GN)

    # ---- log-depth (Hillis-Steele doubling) scan over the chunk time axis ----
    # x_t = lam * x_{t-1} + Bu_t composes associatively.  After the pass with
    # step d, row t holds the prefix over the last min(t+1, 2d) steps, so the
    # multiplier of the shifted operand is exactly lam^d = lampow[d-1].
    d = 1
    while d < TC:                                # static, log2(TC) passes
        lam_d = lampow_ref[d - 1:d]              # (1, TBS, 2GN), pre-broadcast
        lr = lam_d[:, :, 0:GN]
        li = lam_d[:, :, GN:2 * GN]
        lo_re = str_scr[0:TC - d]
        lo_im = sti_scr[0:TC - d]
        up_re = str_scr[d:TC]
        up_im = sti_scr[d:TC]
        str_scr[d:TC] = up_re + lr * lo_re - li * lo_im
        sti_scr[d:TC] = up_im + lr * lo_im + li * lo_re
        d *= 2

    # ---- carry-in from the previous time chunk: x_t += lam^(t+1) * x_carry --
    # Skipped for the first chunk of each batch tile, so the carry scratch
    # never needs zero-initialisation (it is written at the end of every chunk
    # and only read by the *next* chunk of the same batch tile).
    @pl.when(t_idx != 0)
    def _():
        lp = lampow_ref[...]                     # (TC, TBS, 2GN)
        lp_re = lp[:, :, 0:GN]
        lp_im = lp[:, :, GN:2 * GN]
        cr = xr_scr[...]
        ci = xi_scr[...]
        str_scr[...] = str_scr[...] + lp_re * cr - lp_im * ci
        sti_scr[...] = sti_scr[...] + lp_re * ci + lp_im * cr

    # carry-out = state at the last timestep of this chunk
    xr_scr[...] = str_scr[TC - 1]
    xi_scr[...] = sti_scr[TC - 1]

    # ---- output projection: y = Re(states @ C^T) + u @ D^T -------------------
    cdt = wcr_ref.dtype
    sr2d = str_scr[...].reshape(R, GN).astype(cdt)
    si2d = sti_scr[...].reshape(R, GN).astype(cdt)
    y = y_d
    y = y + jnp.dot(sr2d, wcr_ref[...], preferred_element_type=jnp.float32)
    y = y + jnp.dot(si2d, wci_ref[...], preferred_element_type=jnp.float32)
    y_ref[...] = y.reshape(y_ref.shape).astype(y_ref.dtype)


def lru_forward(u, lam_re, lam_im, B_re, B_im, C_re, C_im, D, *,
                time_chunk=None, lane_groups=None, matmul_dtype=jnp.float32):
    """u: (batch, T, IN) f32. Returns y: (batch, T, OUT) f32."""
    Bsz, T, IN = u.shape
    N = lam_re.shape[0]
    OUT = D.shape[0]
    TBS = 8                                      # batch rows in the sublane dim

    # Fold G batch groups into the lane dim so the recurrence uses full
    # (8, G*N) ~ (8, 128) vregs.
    if lane_groups is None:
        G = max(1, 128 // N) if N <= 128 else 1
    else:
        G = max(1, int(lane_groups))
    GN, GIN, GOUT = G * N, G * IN, G * OUT
    TB = G * TBS                                 # batch rows per grid tile
    B_tot = _round_up(Bsz, TB)
    n_bt = B_tot // TB

    # Time chunk: big (amortise ~0.35us grid-step overhead), capped by a
    # per-generation VMEM budget.
    mm_bytes = jnp.dtype(matmul_dtype).itemsize
    if time_chunk is None:
        TC = min(256, _round_up(T, 8))
    else:
        TC = max(1, min(int(time_chunk), _round_up(T, 8)))

    def vmem_est(tc):
        r = tc * TBS
        return (2 * r * GIN * mm_bytes                     # u block (dbl-buf)
                + 2 * r * GOUT * 4                         # y block
                + 2 * tc * TBS * 2 * GN * 4                # lam powers
                + 2 * (GIN * 2 * GN + 2 * GN * GOUT + GIN * GOUT) * mm_bytes
                + 2 * r * GN * 4                           # state scratch re/im
                + 2 * TBS * GN * 4)                        # carried state

    try:
        vmem_cap = int(pltpu.get_tpu_info().vmem_capacity_bytes)
    except Exception:
        vmem_cap = 64 * 1024 * 1024                        # v7x-safe assumption
    budget = int(vmem_cap * 0.5)
    while TC > 8 and vmem_est(TC) > budget:
        TC = max(8, TC // 2)
    T_pad = _round_up(T, TC)
    n_tc = T_pad // TC
    vmem_limit = int(min(vmem_cap, max(32 * 1024 * 1024, int(vmem_est(TC) * 1.5))))

    f32 = jnp.float32
    # ---- input layout: (B, T, IN) -> (T_pad, n_bt*TBS, G*IN), lane-packed ----
    u_p = jnp.pad(u.astype(f32), ((0, B_tot - Bsz), (0, T_pad - T), (0, 0)))
    u_p = u_p.reshape(n_bt, G, TBS, T_pad, IN)
    u_t = jnp.transpose(u_p, (3, 0, 2, 1, 4)).reshape(T_pad, n_bt * TBS, GIN)
    u_t = u_t.astype(matmul_dtype)

    # ---- lambda powers lam^(t+1), t=0..TC-1; G-tiled along lanes and
    #      pre-broadcast over sublanes (hoists all broadcasts out of the kernel)
    lam_c = (lam_re.astype(f32) + 1j * lam_im.astype(f32)).astype(jnp.complex64)
    pows = jnp.cumprod(jnp.broadcast_to(lam_c, (TC, N)), axis=0)         # (TC, N)
    lampow = jnp.concatenate([jnp.tile(jnp.real(pows), (1, G)),
                              jnp.tile(jnp.imag(pows), (1, G))], axis=1)  # (TC, 2GN)
    lampow = jnp.broadcast_to(lampow[:, None, :], (TC, TBS, 2 * GN)).astype(f32)

    # ---- block-diagonal (per lane group) projection weights ------------------
    wb = jnp.concatenate([_block_diag(B_re.T.astype(f32), G),
                          _block_diag(B_im.T.astype(f32), G)], axis=1)    # (GIN, 2GN)
    wcr = _block_diag(C_re.T.astype(f32), G)                              # (GN, GOUT)
    wci = _block_diag((-C_im.T).astype(f32), G)                           # (GN, GOUT)
    wd = _block_diag(D.T.astype(f32), G)                                  # (GIN, GOUT)
    wb, wcr, wci, wd = (w.astype(matmul_dtype) for w in (wb, wcr, wci, wd))

    y_pad = pl.pallas_call(
        lru_kernel,
        out_shape=jax.ShapeDtypeStruct((T_pad, n_bt * TBS, GOUT), jnp.float32),
        grid_spec=pltpu.PrefetchScalarGridSpec(
            num_scalar_prefetch=0,
            grid=(n_bt, n_tc),
            in_specs=[
                pl.BlockSpec((TC, TBS, GIN), lambda b, t: (t, b, 0)),
                pl.BlockSpec((TC, TBS, 2 * GN), lambda b, t: (0, 0, 0)),
                pl.BlockSpec((GIN, 2 * GN), lambda b, t: (0, 0)),
                pl.BlockSpec((GN, GOUT), lambda b, t: (0, 0)),
                pl.BlockSpec((GN, GOUT), lambda b, t: (0, 0)),
                pl.BlockSpec((GIN, GOUT), lambda b, t: (0, 0)),
            ],
            out_specs=pl.BlockSpec((TC, TBS, GOUT), lambda b, t: (t, b, 0)),
            scratch_shapes=[
                pltpu.VMEM((TC, TBS, GN), jnp.float32),   # chunk states (real)
                pltpu.VMEM((TC, TBS, GN), jnp.float32),   # chunk states (imag)
                pltpu.VMEM((TBS, GN), jnp.float32),       # carried state (real)
                pltpu.VMEM((TBS, GN), jnp.float32),       # carried state (imag)
            ],
        ),
        compiler_params=pltpu.CompilerParams(
            dimension_semantics=("parallel", "arbitrary"),
            vmem_limit_bytes=vmem_limit),
    )(u_t, lampow, wb, wcr, wci, wd)

    # (T_pad, n_bt*TBS, G*OUT) -> (B, T, OUT)
    y_pad = y_pad.reshape(T_pad, n_bt, TBS, G, OUT)
    y = jnp.transpose(y_pad, (1, 3, 2, 0, 4)).reshape(B_tot, T_pad, OUT)
    return y[:Bsz, :T, :]


def init_lru_params(key, in_features, out_features, state_features,
                    rmin=0.9, rmax=1.0, max_phase=6.283):
    """Deterministic re-implementation of LRU.__init__ / ss_params in JAX."""
    k = jax.random.split(key, 7)
    D = jax.random.normal(k[0], (out_features, in_features)) / math.sqrt(in_features)
    u1 = jax.random.uniform(k[1], (state_features,))
    u2 = jax.random.uniform(k[2], (state_features,))
    nu_log = jnp.log(-0.5 * jnp.log(u1 * (rmax + rmin) * (rmax - rmin) + rmin ** 2))
    theta_log = jnp.log(max_phase * u2)
    lambda_abs = jnp.exp(-jnp.exp(nu_log))
    gamma_log = jnp.log(jnp.sqrt(1.0 - jnp.square(lambda_abs)))
    B_re = jax.random.normal(k[3], (state_features, in_features)) / math.sqrt(2 * in_features)
    B_im = jax.random.normal(k[4], (state_features, in_features)) / math.sqrt(2 * in_features)
    C_re = jax.random.normal(k[5], (out_features, state_features)) / math.sqrt(state_features)
    C_im = jax.random.normal(k[6], (out_features, state_features)) / math.sqrt(state_features)

    # ss_params()
    lambda_phase = jnp.exp(theta_log)
    lam_re = lambda_abs * jnp.cos(lambda_phase)
    lam_im = lambda_abs * jnp.sin(lambda_phase)
    gammas = jnp.exp(gamma_log)[:, None]
    Bg_re = gammas * B_re
    Bg_im = gammas * B_im
    return lam_re, lam_im, Bg_re, Bg_im, C_re, C_im, D


def lru_reference(u, lam_re, lam_im, B_re, B_im, C_re, C_im, D):
    """Plain-JAX complex reference matching LRU.forward (mode='scan', state=None)."""
    lam = lam_re + 1j * lam_im
    Bc = (B_re + 1j * B_im).astype(jnp.complex64)
    Cc = (C_re + 1j * C_im).astype(jnp.complex64)
    Bu = jnp.einsum('bti,ni->btn', u.astype(jnp.complex64), Bc)   # (B, T, N)
    T = u.shape[1]
    states = []
    x = jnp.zeros((u.shape[0], lam.shape[0]), jnp.complex64)
    for t in range(T):
        x = lam[None, :] * x + Bu[:, t, :]
        states.append(x)
    states = jnp.stack(states, axis=1)                            # (B, T, N)
    y = jnp.real(jnp.einsum('btn,on->bto', states, Cc)) + jnp.einsum('bti,oi->bto', u, D)
    return y


if __name__ == "__main__":
    in_features, out_features, state_features = 32, 32, 32
    key = jax.random.PRNGKey(0)
    k_param, k_in1, k_in2 = jax.random.split(key, 3)
    params = init_lru_params(k_param, in_features, out_features, state_features)

    # Small single-chunk case (batch=2, seq=8).
    batch, seq = 2, 8
    u = jax.random.normal(k_in1, (batch, seq, in_features), dtype=jnp.float32)
    y = jax.block_until_ready(lru_forward(u, *params))
    y_ref = lru_reference(u, *params)
    assert y.shape == (batch, seq, out_features)
    assert jnp.allclose(y, y_ref, rtol=1e-4, atol=1e-4), \
        f"max abs err {jnp.max(jnp.abs(y - y_ref))}"

    # Multi-chunk case exercising the cross-chunk carry and time padding.
    batch2, seq2 = 4, 40
    u2 = jax.random.normal(k_in2, (batch2, seq2, in_features), dtype=jnp.float32)
    y2 = jax.block_until_ready(lru_forward(u2, *params, time_chunk=16))
    y2_ref = lru_reference(u2, *params)
    assert y2.shape == (batch2, seq2, out_features)
    assert jnp.allclose(y2, y2_ref, rtol=1e-4, atol=1e-4), \
        f"max abs err {jnp.max(jnp.abs(y2 - y2_ref))}"

    print("KERNEL_OK")
</pallas_src>

<mosaic_0001>
module attributes {stable_mosaic.version = 11 : i64} {
  func.func @lru_kernel(%arg0: i32, %arg1: i32, %arg2: memref<8x8x128xf32, #tpu.memory_space<vmem>>, %arg3: memref<8x8x256xf32, #tpu.memory_space<vmem>>, %arg4: memref<128x256xf32, #tpu.memory_space<vmem>>, %arg5: memref<128x128xf32, #tpu.memory_space<vmem>>, %arg6: memref<128x128xf32, #tpu.memory_space<vmem>>, %arg7: memref<128x128xf32, #tpu.memory_space<vmem>>, %arg8: memref<8x8x128xf32, #tpu.memory_space<vmem>>, %arg9: memref<8x8x128xf32, #tpu.memory_space<vmem>>, %arg10: memref<8x8x128xf32, #tpu.memory_space<vmem>>, %arg11: memref<8x128xf32, #tpu.memory_space<vmem>>, %arg12: memref<8x128xf32, #tpu.memory_space<vmem>>) attributes {dimension_semantics = [#tpu.dimension_semantics<parallel>, #tpu.dimension_semantics<arbitrary>], iteration_bounds = array<i64: 1, 1>, scalar_prefetch = 0 : i64, scratch_operands = 4 : i64, tpu.core_type = #tpu.core_type<tc>, window_params = [{transform_indices = @transform_0, window_bounds = array<i64: 8, 8, 128>}, {pipeline_mode = #tpu.pipeline_mode<synchronous>, transform_indices = @transform_1, window_bounds = array<i64: 8, 8, 256>}, {pipeline_mode = #tpu.pipeline_mode<synchronous>, transform_indices = @transform_2, window_bounds = array<i64: 128, 256>}, {pipeline_mode = #tpu.pipeline_mode<synchronous>, transform_indices = @transform_3, window_bounds = array<i64: 128, 128>}, {pipeline_mode = #tpu.pipeline_mode<synchronous>, transform_indices = @transform_4, window_bounds = array<i64: 128, 128>}, {pipeline_mode = #tpu.pipeline_mode<synchronous>, transform_indices = @transform_5, window_bounds = array<i64: 128, 128>}, {transform_indices = @transform_6, window_bounds = array<i64: 8, 8, 128>}]} {
    %c0 = arith.constant 0 : index
    %c0_0 = arith.constant 0 : index
    %c0_1 = arith.constant 0 : index
    %0 = vector.load %arg2[%c0, %c0_0, %c0_1] : memref<8x8x128xf32, #tpu.memory_space<vmem>>, vector<8x8x128xf32>
    %1 = vector.shape_cast %0 : vector<8x8x128xf32> to vector<64x128xf32>
    %c0_2 = arith.constant 0 : index
    %c0_3 = arith.constant 0 : index
    %2 = vector.load %arg4[%c0_2, %c0_3] : memref<128x256xf32, #tpu.memory_space<vmem>>, vector<128x256xf32>
    %cst = arith.constant dense<0.000000e+00> : vector<64x256xf32>
    %3 = tpu.matmul %1, %2, %cst {dimension_numbers = #tpu.dot_dimension_numbers<[1], [0], [0], [1], [0, 0, 1, 1], [], []>} : vector<64x128xf32>, vector<128x256xf32>, vector<64x256xf32> -> vector<64x256xf32>
    %c0_4 = arith.constant 0 : index
    %c0_5 = arith.constant 0 : index
    %4 = vector.load %arg7[%c0_4, %c0_5] : memref<128x128xf32, #tpu.memory_space<vmem>>, vector<128x128xf32>
    %cst_6 = arith.constant dense<0.000000e+00> : vector<64x128xf32>
    %5 = tpu.matmul %1, %4, %cst_6 {dimension_numbers = #tpu.dot_dimension_numbers<[1], [0], [0], [1], [0, 0, 1, 1], [], []>} : vector<64x128xf32>, vector<128x128xf32>, vector<64x128xf32> -> vector<64x128xf32>
    %6 = vector.extract_strided_slice %3 {offsets = [0, 0], sizes = [64, 128], strides = [1, 1]} : vector<64x256xf32> to vector<64x128xf32>
    %7 = vector.shape_cast %6 : vector<64x128xf32> to vector<8x8x128xf32>
    %c0_7 = arith.constant 0 : index
    %c0_8 = arith.constant 0 : index
    %c0_9 = arith.constant 0 : index
    %8 = vector.load %arg9[%c0_7, %c0_8, %c0_9] : memref<8x8x128xf32, #tpu.memory_space<vmem>>, vector<8x8x128xf32>
    tpu.vector_store %arg9[%c0_7, %c0_8, %c0_9], %7 {strides = array<i32>} : memref<8x8x128xf32, #tpu.memory_space<vmem>>, vector<8x8x128xf32>,
    %9 = vector.extract_strided_slice %3 {offsets = [0, 128], sizes = [64, 128], strides = [1, 1]} : vector<64x256xf32> to vector<64x128xf32>
    %10 = vector.shape_cast %9 : vector<64x128xf32> to vector<8x8x128xf32>
    %c0_10 = arith.constant 0 : index
    %c0_11 = arith.constant 0 : index
    %c0_12 = arith.constant 0 : index
    %11 = vector.load %arg10[%c0_10, %c0_11, %c0_12] : memref<8x8x128xf32, #tpu.memory_space<vmem>>, vector<8x8x128xf32>
    tpu.vector_store %arg10[%c0_10, %c0_11, %c0_12], %10 {strides = array<i32>} : memref<8x8x128xf32, #tpu.memory_space<vmem>>, vector<8x8x128xf32>,
    %c0_13 = arith.constant 0 : index
    %c0_14 = arith.constant 0 : index
    %c0_15 = arith.constant 0 : index
    %12 = vector.load %arg3[%c0_13, %c0_14, %c0_15] : memref<8x8x256xf32, #tpu.memory_space<vmem>>, vector<1x8x256xf32>
    %13 = vector.extract_strided_slice %12 {offsets = [0, 0, 0], sizes = [1, 8, 128], strides = [1, 1, 1]} : vector<1x8x256xf32> to vector<1x8x128xf32>
    %14 = vector.extract_strided_slice %12 {offsets = [0, 0, 128], sizes = [1, 8, 128], strides = [1, 1, 1]} : vector<1x8x256xf32> to vector<1x8x128xf32>
    %c0_16 = arith.constant 0 : index
    %c0_17 = arith.constant 0 : index
    %c0_18 = arith.constant 0 : index
    %15 = vector.load %arg9[%c0_16, %c0_17, %c0_18] : memref<8x8x128xf32, #tpu.memory_space<vmem>>, vector<7x8x128xf32>
    %c0_19 = arith.constant 0 : index
    %c0_20 = arith.constant 0 : index
    %c0_21 = arith.constant 0 : index
    %16 = vector.load %arg10[%c0_19, %c0_20, %c0_21] : memref<8x8x128xf32, #tpu.memory_space<vmem>>, vector<7x8x128xf32>
    %c1 = arith.constant 1 : index
    %c0_22 = arith.constant 0 : index
    %c0_23 = arith.constant 0 : index
    %17 = vector.load %arg9[%c1, %c0_22, %c0_23] : memref<8x8x128xf32, #tpu.memory_space<vmem>>, vector<7x8x128xf32>
    %c1_24 = arith.constant 1 : index
    %c0_25 = arith.constant 0 : index
    %c0_26 = arith.constant 0 : index
    %18 = vector.load %arg10[%c1_24, %c0_25, %c0_26] : memref<8x8x128xf32, #tpu.memory_space<vmem>>, vector<7x8x128xf32>
    %19 = vector.broadcast %13 : vector<1x8x128xf32> to vector<7x8x128xf32>
    %20 = arith.mulf %19, %15 : vector<7x8x128xf32>
    %21 = arith.addf %17, %20 : vector<7x8x128xf32>
    %22 = vector.broadcast %14 : vector<1x8x128xf32> to vector<7x8x128xf32>
    %23 = arith.mulf %22, %16 : vector<7x8x128xf32>
    %24 = arith.subf %21, %23 : vector<7x8x128xf32>
    %c1_27 = arith.constant 1 : index
    %c0_28 = arith.constant 0 : index
    %c0_29 = arith.constant 0 : index
    %25 = vector.load %arg9[%c1_27, %c0_28, %c0_29] : memref<8x8x128xf32, #tpu.memory_space<vmem>>, vector<7x8x128xf32>
    tpu.vector_store %arg9[%c1_27, %c0_28, %c0_29], %24 {strides = array<i32>} : memref<8x8x128xf32, #tpu.memory_space<vmem>>, vector<7x8x128xf32>,
    %26 = vector.broadcast %13 : vector<1x8x128xf32> to vector<7x8x128xf32>
    %27 = arith.mulf %26, %16 : vector<7x8x128xf32>
    %28 = arith.addf %18, %27 : vector<7x8x128xf32>
    %29 = vector.broadcast %14 : vector<1x8x128xf32> to vector<7x8x128xf32>
    %30 = arith.mulf %29, %15 : vector<7x8x128xf32>
    %31 = arith.addf %28, %30 : vector<7x8x128xf32>
    %c1_30 = arith.constant 1 : index
    %c0_31 = arith.constant 0 : index
    %c0_32 = arith.constant 0 : index
    %32 = vector.load %arg10[%c1_30, %c0_31, %c0_32] : memref<8x8x128xf32, #tpu.memory_space<vmem>>, vector<7x8x128xf32>
    tpu.vector_store %arg10[%c1_30, %c0_31, %c0_32], %31 {strides = array<i32>} : memref<8x8x128xf32, #tpu.memory_space<vmem>>, vector<7x8x128xf32>,
    %c1_33 = arith.constant 1 : index
    %c0_34 = arith.constant 0 : index
    %c0_35 = arith.constant 0 : index
    %33 = vector.load %arg3[%c1_33, %c0_34, %c0_35] : memref<8x8x256xf32, #tpu.memory_space<vmem>>, vector<1x8x256xf32>
    %34 = vector.extract_strided_slice %33 {offsets = [0, 0, 0], sizes = [1, 8, 128], strides = [1, 1, 1]} : vector<1x8x256xf32> to vector<1x8x128xf32>
    %35 = vector.extract_strided_slice %33 {offsets = [0, 0, 128], sizes = [1, 8, 128], strides = [1, 1, 1]} : vector<1x8x256xf32> to vector<1x8x128xf32>
    %c0_36 = arith.constant 0 : index
    %c0_37 = arith.constant 0 : index
    %c0_38 = arith.constant 0 : index
    %36 = vector.load %arg9[%c0_36, %c0_37, %c0_38] : memref<8x8x128xf32, #tpu.memory_space<vmem>>, vector<6x8x128xf32>
    %c0_39 = arith.constant 0 : index
    %c0_40 = arith.constant 0 : index
    %c0_41 = arith.constant 0 : index
    %37 = vector.load %arg10[%c0_39, %c0_40, %c0_41] : memref<8x8x128xf32, #tpu.memory_space<vmem>>, vector<6x8x128xf32>
    %c2 = arith.constant 2 : index
    %c0_42 = arith.constant 0 : index
    %c0_43 = arith.constant 0 : index
    %38 = vector.load %arg9[%c2, %c0_42, %c0_43] : memref<8x8x128xf32, #tpu.memory_space<vmem>>, vector<6x8x128xf32>
    %c2_44 = arith.constant 2 : index
    %c0_45 = arith.constant 0 : index
    %c0_46 = arith.constant 0 : index
    %39 = vector.load %arg10[%c2_44, %c0_45, %c0_46] : memref<8x8x128xf32, #tpu.memory_space<vmem>>, vector<6x8x128xf32>
    %40 = vector.broadcast %34 : vector<1x8x128xf32> to vector<6x8x128xf32>
    %41 = arith.mulf %40, %36 : vector<6x8x128xf32>
    %42 = arith.addf %38, %41 : vector<6x8x128xf32>
    %43 = vector.broadcast %35 : vector<1x8x128xf32> to vector<6x8x128xf32>
    %44 = arith.mulf %43, %37 : vector<6x8x128xf32>
    %45 = arith.subf %42, %44 : vector<6x8x128xf32>
    %c2_47 = arith.constant 2 : index
    %c0_48 = arith.constant 0 : index
    %c0_49 = arith.constant 0 : index
    %46 = vector.load %arg9[%c2_47, %c0_48, %c0_49] : memref<8x8x128xf32, #tpu.memory_space<vmem>>, vector<6x8x128xf32>
    tpu.vector_store %arg9[%c2_47, %c0_48, %c0_49], %45 {strides = array<i32>} : memref<8x8x128xf32, #tpu.memory_space<vmem>>, vector<6x8x128xf32>,
    %47 = vector.broadcast %34 : vector<1x8x128xf32> to vector<6x8x128xf32>
    %48 = arith.mulf %47, %37 : vector<6x8x128xf32>
    %49 = arith.addf %39, %48 : vector<6x8x128xf32>
    %50 = vector.broadcast %35 : vector<1x8x128xf32> to vector<6x8x128xf32>
    %51 = arith.mulf %50, %36 : vector<6x8x128xf32>
    %52 = arith.addf %49, %51 : vector<6x8x128xf32>
    %c2_50 = arith.constant 2 : index
    %c0_51 = arith.constant 0 : index
    %c0_52 = arith.constant 0 : index
    %53 = vector.load %arg10[%c2_50, %c0_51, %c0_52] : memref<8x8x128xf32, #tpu.memory_space<vmem>>, vector<6x8x128xf32>
    tpu.vector_store %arg10[%c2_50, %c0_51, %c0_52], %52 {strides = array<i32>} : memref<8x8x128xf32, #tpu.memory_space<vmem>>, vector<6x8x128xf32>,
    %c3 = arith.constant 3 : index
    %c0_53 = arith.constant 0 : index
    %c0_54 = arith.constant 0 : index
    %54 = vector.load %arg3[%c3, %c0_53, %c0_54] : memref<8x8x256xf32, #tpu.memory_space<vmem>>, vector<1x8x256xf32>
    %55 = vector.extract_strided_slice %54 {offsets = [0, 0, 0], sizes = [1, 8, 128], strides = [1, 1, 1]} : vector<1x8x256xf32> to vector<1x8x128xf32>
    %56 = vector.extract_strided_slice %54 {offsets = [0, 0, 128], sizes = [1, 8, 128], strides = [1, 1, 1]} : vector<1x8x256xf32> to vector<1x8x128xf32>
    %c0_55 = arith.constant 0 : index
    %c0_56 = arith.constant 0 : index
    %c0_57 = arith.constant 0 : index
    %57 = vector.load %arg9[%c0_55, %c0_56, %c0_57] : memref<8x8x128xf32, #tpu.memory_space<vmem>>, vector<4x8x128xf32>
    %c0_58 = arith.constant 0 : index
    %c0_59 = arith.constant 0 : index
    %c0_60 = arith.constant 0 : index
    %58 = vector.load %arg10[%c0_58, %c0_59, %c0_60] : memref<8x8x128xf32, #tpu.memory_space<vmem>>, vector<4x8x128xf32>
    %c4 = arith.constant 4 : index
    %c0_61 = arith.constant 0 : index
    %c0_62 = arith.constant 0 : index
    %59 = vector.load %arg9[%c4, %c0_61, %c0_62] : memref<8x8x128xf32, #tpu.memory_space<vmem>>, vector<4x8x128xf32>
    %c4_63 = arith.constant 4 : index
    %c0_64 = arith.constant 0 : index
    %c0_65 = arith.constant 0 : index
    %60 = vector.load %arg10[%c4_63, %c0_64, %c0_65] : memref<8x8x128xf32, #tpu.memory_space<vmem>>, vector<4x8x128xf32>
    %61 = vector.broadcast %55 : vector<1x8x128xf32> to vector<4x8x128xf32>
    %62 = arith.mulf %61, %57 : vector<4x8x128xf32>
    %63 = arith.addf %59, %62 : vector<4x8x128xf32>
    %64 = vector.broadcast %56 : vector<1x8x128xf32> to vector<4x8x128xf32>
    %65 = arith.mulf %64, %58 : vector<4x8x128xf32>
    %66 = arith.subf %63, %65 : vector<4x8x128xf32>
    %c4_66 = arith.constant 4 : index
    %c0_67 = arith.constant 0 : index
    %c0_68 = arith.constant 0 : index
    %67 = vector.load %arg9[%c4_66, %c0_67, %c0_68] : memref<8x8x128xf32, #tpu.memory_space<vmem>>, vector<4x8x128xf32>
    tpu.vector_store %arg9[%c4_66, %c0_67, %c0_68], %66 {strides = array<i32>} : memref<8x8x128xf32, #tpu.memory_space<vmem>>, vector<4x8x128xf32>,
    %68 = vector.broadcast %55 : vector<1x8x128xf32> to vector<4x8x128xf32>
    %69 = arith.mulf %68, %58 : vector<4x8x128xf32>
    %70 = arith.addf %60, %69 : vector<4x8x128xf32>
    %71 = vector.broadcast %56 : vector<1x8x128xf32> to vector<4x8x128xf32>
    %72 = arith.mulf %71, %57 : vector<4x8x128xf32>
    %73 = arith.addf %70, %72 : vector<4x8x128xf32>
    %c4_69 = arith.constant 4 : index
    %c0_70 = arith.constant 0 : index
    %c0_71 = arith.constant 0 : index
    %74 = vector.load %arg10[%c4_69, %c0_70, %c0_71] : memref<8x8x128xf32, #tpu.memory_space<vmem>>, vector<4x8x128xf32>
    tpu.vector_store %arg10[%c4_69, %c0_70, %c0_71], %73 {strides = array<i32>} : memref<8x8x128xf32, #tpu.memory_space<vmem>>, vector<4x8x128xf32>,
    %c0_i32 = arith.constant 0 : i32
    %75 = arith.cmpi ne, %arg1, %c0_i32 : i32
    %76 = arith.extui %75 : i1 to i32
    %c0_i32_72 = arith.constant 0 : i32
    %77 = arith.cmpi ne, %76, %c0_i32_72 : i32
    scf.if %77 {
      %c0_97 = arith.constant 0 : index
      %c0_98 = arith.constant 0 : index
      %c0_99 = arith.constant 0 : index
      %96 = vector.load %arg3[%c0_97, %c0_98, %c0_99] : memref<8x8x256xf32, #tpu.memory_space<vmem>>, vector<8x8x256xf32>
      %97 = vector.extract_strided_slice %96 {offsets = [0, 0, 0], sizes = [8, 8, 128], strides = [1, 1, 1]} : vector<8x8x256xf32> to vector<8x8x128xf32>
      %98 = vector.extract_strided_slice %96 {offsets = [0, 0, 128], sizes = [8, 8, 128], strides = [1, 1, 1]} : vector<8x8x256xf32> to vector<8x8x128xf32>
      %c0_100 = arith.constant 0 : index
      %c0_101 = arith.constant 0 : index
      %99 = vector.load %arg11[%c0_100, %c0_101] : memref<8x128xf32, #tpu.memory_space<vmem>>, vector<8x128xf32>
      %c0_102 = arith.constant 0 : index
      %c0_103 = arith.constant 0 : index
      %100 = vector.load %arg12[%c0_102, %c0_103] : memref<8x128xf32, #tpu.memory_space<vmem>>, vector<8x128xf32>
      %c0_104 = arith.constant 0 : index
      %c0_105 = arith.constant 0 : index
      %c0_106 = arith.constant 0 : index
      %101 = vector.load %arg9[%c0_104, %c0_105, %c0_106] : memref<8x8x128xf32, #tpu.memory_space<vmem>>, vector<8x8x128xf32>
      %102 = vector.shape_cast %99 : vector<8x128xf32> to vector<1x8x128xf32>
      %103 = vector.broadcast %102 : vector<1x8x128xf32> to vector<8x8x128xf32>
      %104 = arith.mulf %97, %103 : vector<8x8x128xf32>
      %105 = arith.addf %101, %104 : vector<8x8x128xf32>
      %106 = vector.shape_cast %100 : vector<8x128xf32> to vector<1x8x128xf32>
      %107 = vector.broadcast %106 : vector<1x8x128xf32> to vector<8x8x128xf32>
      %108 = arith.mulf %98, %107 : vector<8x8x128xf32>
      %109 = arith.subf %105, %108 : vector<8x8x128xf32>
      %c0_107 = arith.constant 0 : index
      %c0_108 = arith.constant 0 : index
      %c0_109 = arith.constant 0 : index
      %110 = vector.load %arg9[%c0_107, %c0_108, %c0_109] : memref<8x8x128xf32, #tpu.memory_space<vmem>>, vector<8x8x128xf32>
      tpu.vector_store %arg9[%c0_107, %c0_108, %c0_109], %109 {strides = array<i32>} : memref<8x8x128xf32, #tpu.memory_space<vmem>>, vector<8x8x128xf32>,
      %c0_110 = arith.constant 0 : index
      %c0_111 = arith.constant 0 : index
      %c0_112 = arith.constant 0 : index
      %111 = vector.load %arg10[%c0_110, %c0_111, %c0_112] : memref<8x8x128xf32, #tpu.memory_space<vmem>>, vector<8x8x128xf32>
      %112 = vector.shape_cast %100 : vector<8x128xf32> to vector<1x8x128xf32>
      %113 = vector.broadcast %112 : vector<1x8x128xf32> to vector<8x8x128xf32>
      %114 = arith.mulf %97, %113 : vector<8x8x128xf32>
      %115 = arith.addf %111, %114 : vector<8x8x128xf32>
      %116 = vector.shape_cast %99 : vector<8x128xf32> to vector<1x8x128xf32>
      %117 = vector.broadcast %116 : vector<1x8x128xf32> to vector<8x8x128xf32>
      %118 = arith.mulf %98, %117 : vector<8x8x128xf32>
      %119 = arith.addf %115, %118 : vector<8x8x128xf32>
      %c0_113 = arith.constant 0 : index
      %c0_114 = arith.constant 0 : index
      %c0_115 = arith.constant 0 : index
      %120 = vector.load %arg10[%c0_113, %c0_114, %c0_115] : memref<8x8x128xf32, #tpu.memory_space<vmem>>, vector<8x8x128xf32>
      tpu.vector_store %arg10[%c0_113, %c0_114, %c0_115], %119 {strides = array<i32>} : memref<8x8x128xf32, #tpu.memory_space<vmem>>, vector<8x8x128xf32>,
    } else {
    }
    %c7 = arith.constant 7 : index
    %c0_73 = arith.constant 0 : index
    %c0_74 = arith.constant 0 : index
    %78 = vector.load %arg9[%c7, %c0_73, %c0_74] : memref<8x8x128xf32, #tpu.memory_space<vmem>>, vector<1x8x128xf32>
    %79 = vector.shape_cast %78 : vector<1x8x128xf32> to vector<8x128xf32>
    %c0_75 = arith.constant 0 : index
    %c0_76 = arith.constant 0 : index
    %80 = vector.load %arg11[%c0_75, %c0_76] : memref<8x128xf32, #tpu.memory_space<vmem>>, vector<8x128xf32>
    tpu.vector_store %arg11[%c0_75, %c0_76], %79 {strides = array<i32>} : memref<8x128xf32, #tpu.memory_space<vmem>>, vector<8x128xf32>,
    %c7_77 = arith.constant 7 : index
    %c0_78 = arith.constant 0 : index
    %c0_79 = arith.constant 0 : index
    %81 = vector.load %arg10[%c7_77, %c0_78, %c0_79] : memref<8x8x128xf32, #tpu.memory_space<vmem>>, vector<1x8x128xf32>
    %82 = vector.shape_cast %81 : vector<1x8x128xf32> to vector<8x128xf32>
    %c0_80 = arith.constant 0 : index
    %c0_81 = arith.constant 0 : index
    %83 = vector.load %arg12[%c0_80, %c0_81] : memref<8x128xf32, #tpu.memory_space<vmem>>, vector<8x128xf32>
    tpu.vector_store %arg12[%c0_80, %c0_81], %82 {strides = array<i32>} : memref<8x128xf32, #tpu.memory_space<vmem>>, vector<8x128xf32>,
    %c0_82 = arith.constant 0 : index
    %c0_83 = arith.constant 0 : index
    %c0_84 = arith.constant 0 : index
    %84 = vector.load %arg9[%c0_82, %c0_83, %c0_84] : memref<8x8x128xf32, #tpu.memory_space<vmem>>, vector<8x8x128xf32>
    %85 = vector.shape_cast %84 : vector<8x8x128xf32> to vector<64x128xf32>
    %c0_85 = arith.constant 0 : index
    %c0_86 = arith.constant 0 : index
    %c0_87 = arith.constant 0 : index
    %86 = vector.load %arg10[%c0_85, %c0_86, %c0_87] : memref<8x8x128xf32, #tpu.memory_space<vmem>>, vector<8x8x128xf32>
    %87 = vector.shape_cast %86 : vector<8x8x128xf32> to vector<64x128xf32>
    %c0_88 = arith.constant 0 : index
    %c0_89 = arith.constant 0 : index
    %88 = vector.load %arg5[%c0_88, %c0_89] : memref<128x128xf32, #tpu.memory_space<vmem>>, vector<128x128xf32>
    %cst_90 = arith.constant dense<0.000000e+00> : vector<64x128xf32>
    %89 = tpu.matmul %85, %88, %cst_90 {dimension_numbers = #tpu.dot_dimension_numbers<[1], [0], [0], [1], [0, 0, 1, 1], [], []>} : vector<64x128xf32>, vector<128x128xf32>, vector<64x128xf32> -> vector<64x128xf32>
    %90 = arith.addf %5, %89 : vector<64x128xf32>
    %c0_91 = arith.constant 0 : index
    %c0_92 = arith.constant 0 : index
    %91 = vector.load %arg6[%c0_91, %c0_92] : memref<128x128xf32, #tpu.memory_space<vmem>>, vector<128x128xf32>
    %cst_93 = arith.constant dense<0.000000e+00> : vector<64x128xf32>
    %92 = tpu.matmul %87, %91, %cst_93 {dimension_numbers = #tpu.dot_dimension_numbers<[1], [0], [0], [1], [0, 0, 1, 1], [], []>} : vector<64x128xf32>, vector<128x128xf32>, vector<64x128xf32> -> vector<64x128xf32>
    %93 = arith.addf %90, %92 : vector<64x128xf32>
    %94 = vector.shape_cast %93 : vector<64x128xf32> to vector<8x8x128xf32>
    %c0_94 = arith.constant 0 : index
    %c0_95 = arith.constant 0 : index
    %c0_96 = arith.constant 0 : index
    %95 = vector.load %arg8[%c0_94, %c0_95, %c0_96] : memref<8x8x128xf32, #tpu.memory_space<vmem>>, vector<8x8x128xf32>
    tpu.vector_store %arg8[%c0_94, %c0_95, %c0_96], %94 {strides = array<i32>} : memref<8x8x128xf32, #tpu.memory_space<vmem>>, vector<8x8x128xf32>,
    return
  }
  func.func @transform_0(%arg0: i32, %arg1: i32) -> (i32, i32, i32) {
    %c0_i32 = arith.constant 0 : i32
    %c0_i32_0 = arith.constant 0 : i32
    return %arg1, %arg0, %c0_i32 : i32, i32, i32
  }
  func.func @transform_1(%arg0: i32, %arg1: i32) -> (i32, i32, i32) {
    %c0_i32 = arith.constant 0 : i32
    %c0_i32_0 = arith.constant 0 : i32
    %c0_i32_1 = arith.constant 0 : i32
    %c0_i32_2 = arith.constant 0 : i32
    return %c0_i32, %c0_i32_0, %c0_i32_1 : i32, i32, i32
  }
  func.func @transform_2(%arg0: i32, %arg1: i32) -> (i32, i32) {
    %c0_i32 = arith.constant 0 : i32
    %c0_i32_0 = arith.constant 0 : i32
    %c0_i32_1 = arith.constant 0 : i32
    return %c0_i32, %c0_i32_0 : i32, i32
  }
  func.func @transform_3(%arg0: i32, %arg1: i32) -> (i32, i32) {
    %c0_i32 = arith.constant 0 : i32
    %c0_i32_0 = arith.constant 0 : i32
    %c0_i32_1 = arith.constant 0 : i32
    return %c0_i32, %c0_i32_0 : i32, i32
  }
  func.func @transform_4(%arg0: i32, %arg1: i32) -> (i32, i32) {
    %c0_i32 = arith.constant 0 : i32
    %c0_i32_0 = arith.constant 0 : i32
    %c0_i32_1 = arith.constant 0 : i32
    return %c0_i32, %c0_i32_0 : i32, i32
  }
  func.func @transform_5(%arg0: i32, %arg1: i32) -> (i32, i32) {
    %c0_i32 = arith.constant 0 : i32
    %c0_i32_0 = arith.constant 0 : i32
    %c0_i32_1 = arith.constant 0 : i32
    return %c0_i32, %c0_i32_0 : i32, i32
  }
  func.func @transform_6(%arg0: i32, %arg1: i32) -> (i32, i32, i32) {
    %c0_i32 = arith.constant 0 : i32
    %c0_i32_0 = arith.constant 0 : i32
    return %arg1, %arg0, %c0_i32 : i32, i32, i32
  }
}

</mosaic_0001>

<llo_original>
// kernel: tpu_custom_call.1
$region0: #{tpu_custom_call.1}
  #allocation0 [shape = 'u32[]', space=smem, size = 0x4, offset = 0x4, fixed_abs, tag = 'smem constant byte address 0x4 - core index']
  #allocation1 [shape = 'u32[144,128]{1,0:T(1,128)}', space=vmem, size = 0x12000, scoped, tag = 'internal scratch']
  #allocation2 [shape = 'f32[8,8,128]{2,1,0:T(8,128)}', space=vmem, size = 0x8000, scoped, tag = 'scratch operand']
  #allocation3 [shape = 'f32[8,8,128]{2,1,0:T(8,128)}', space=vmem, size = 0x8000, scoped, tag = 'scratch operand']
  #allocation4 [shape = 'f32[8,128]{1,0:T(8,128)}', space=vmem, size = 0x1000, scoped, tag = 'scratch operand']
  #allocation5 [shape = 'f32[8,128]{1,0:T(8,128)}', space=vmem, size = 0x1000, scoped, tag = 'scratch operand']
  %s0 = inlined_call_operand.hbm [shape: f32[8,8,128], index: 0, kind: input, shape index: {}]
  %s1 = inlined_call_operand.hbm [shape: f32[8,8,256], index: 1, kind: input, shape index: {}]
  %s2 = inlined_call_operand.hbm [shape: f32[128,256], index: 2, kind: input, shape index: {}]
  %s3 = inlined_call_operand.hbm [shape: f32[128,128], index: 3, kind: input, shape index: {}]
  %s4 = inlined_call_operand.hbm [shape: f32[128,128], index: 4, kind: input, shape index: {}]
  %s5 = inlined_call_operand.hbm [shape: f32[128,128], index: 5, kind: input, shape index: {}]
  %s6 = inlined_call_operand.hbm [shape: f32[8,8,128], index: 6, kind: output, shape index: {}]
  %s7 = sld [smem:[#allocation0]]
  $region62: #{tpu_custom_call.1} parent=0
    _
  %s9 = ssub.s32 1, %s7
  %s10 = scalar_select 0, %s9, %s7
  $region1: #{tpu_custom_call.1} parent=0
    #allocation6 [shape = 'u8[32768]{0}', space=vmem, size = 0x8000, scoped, tag = 'input window, operand 0, single buffered']
    #allocation7 [shape = 's32[1]{0}', space=sflag, size = 0x4, scoped, tag = 'scoped memory for tpu_custom_call.1']
    #allocation8 [shape = 's32[1]{0}', space=sflag, size = 0x4, scoped, tag = 'scoped memory for tpu_custom_call.1']
    #allocation9 [shape = 'u8[65536]{0}', space=vmem, size = 0x10000, scoped, tag = 'input window, operand 1, single buffered']
    #allocation10 [shape = 's32[1]{0}', space=sflag, size = 0x4, scoped, tag = 'scoped memory for tpu_custom_call.1']
    #allocation11 [shape = 'u8[131072]{0}', space=vmem, size = 0x20000, scoped, tag = 'input window, operand 2, single buffered']
    #allocation12 [shape = 'u8[65536]{0}', space=vmem, size = 0x10000, scoped, tag = 'input window, operand 3, single buffered']
    #allocation13 [shape = 's32[1]{0}', space=sflag, size = 0x4, scoped, tag = 'scoped memory for tpu_custom_call.1']
    #allocation14 [shape = 'u8[65536]{0}', space=vmem, size = 0x10000, scoped, tag = 'input window, operand 4, single buffered']
    #allocation15 [shape = 'u8[65536]{0}', space=vmem, size = 0x10000, scoped, tag = 'input window, operand 5, single buffered']
    #allocation16 [shape = 's32[1]{0}', space=sflag, size = 0x4, scoped, tag = 'scoped memory for tpu_custom_call.1']
    #allocation17 [shape = 'u8[32768]{0}', space=vmem, size = 0x8000, scoped, tag = 'output window, operand 0, single buffered']
    %11 = vsyncpa [#allocation7], 0
    %12 = vsyncpa [#allocation10], 0
    %13 = vsyncpa [#allocation13], 0
    %14 = vsyncpa [#allocation16], 0
    %15 = vsyncpa [#allocation8], 0
    // Predicated region
    $region2: #{tpu_custom_call.1} parent=1 // pred_check
      _
    $region3: #{tpu_custom_call.1} parent=1 // pred_check_branch
      %17 = sbr.rel (0) target = $region5
    $region4: #{tpu_custom_call.1} parent=1 // pred_region
      %s19 = ssub.s32 1024, 1024
      %20 = vsyncadd [#allocation7], %s19
      %s21 = sshll.u32 [#allocation6], 4
      %s22 = int_to_ptr.vmem [resolvable:$true] %s21
      %27 = dma.hbm_to_vmem [thread:$0]  %s0, 1024, %s22, [#allocation7], 128, 128, 8
    $region5: #{tpu_custom_call.1} parent=1 // pred_fallthru
      _
    // Predicated region
    $region6: #{tpu_custom_call.1} parent=1 // pred_check
      _
    $region7: #{tpu_custom_call.1} parent=1 // pred_check_branch
      %29 = sbr.rel (0) target = $region9
    $region8: #{tpu_custom_call.1} parent=1 // pred_region
      %s31 = ssub.s32 2048, 2048
      %32 = vsyncadd [#allocation10], %s31
      %s33 = sshll.u32 [#allocation9], 4
      %s34 = int_to_ptr.vmem [resolvable:$true] %s33
      %39 = dma.hbm_to_vmem [thread:$0]  %s1, 2048, %s34, [#allocation10], 256, 256, 16
    $region9: #{tpu_custom_call.1} parent=1 // pred_fallthru
      _
    // Predicated region
    $region10: #{tpu_custom_call.1} parent=1 // pred_check
      _
    $region11: #{tpu_custom_call.1} parent=1 // pred_check_branch
      %41 = sbr.rel (0) target = $region13
    $region12: #{tpu_custom_call.1} parent=1 // pred_region
      %s43 = ssub.s32 4096, 4096
      %44 = vsyncadd [#allocation10], %s43
      %s45 = sshll.u32 [#allocation11], 4
      %s46 = int_to_ptr.vmem [resolvable:$true] %s45
      %51 = dma.hbm_to_vmem [thread:$0]  %s2, 4096, %s46, [#allocation10], 256, 256, 16
    $region13: #{tpu_custom_call.1} parent=1 // pred_fallthru
      _
    // Predicated region
    $region14: #{tpu_custom_call.1} parent=1 // pred_check
      _
    $region15: #{tpu_custom_call.1} parent=1 // pred_check_branch
      %53 = sbr.rel (0) target = $region17
    $region16: #{tpu_custom_call.1} parent=1 // pred_region
      %s55 = ssub.s32 2048, 2048
      %56 = vsyncadd [#allocation13], %s55
      %s57 = sshll.u32 [#allocation12], 4
      %s58 = int_to_ptr.vmem [resolvable:$true] %s57
      %63 = dma.hbm_to_vmem [thread:$0]  %s3, 2048, %s58, [#allocation13], 128, 128, 8
    $region17: #{tpu_custom_call.1} parent=1 // pred_fallthru
      _
    // Predicated region
    $region18: #{tpu_custom_call.1} parent=1 // pred_check
      _
    $region19: #{tpu_custom_call.1} parent=1 // pred_check_branch
      %65 = sbr.rel (0) target = $region21
    $region20: #{tpu_custom_call.1} parent=1 // pred_region
      %s67 = ssub.s32 2048, 2048
      %68 = vsyncadd [#allocation13], %s67
      %s69 = sshll.u32 [#allocation14], 4
      %s70 = int_to_ptr.vmem [resolvable:$true] %s69
      %75 = dma.hbm_to_vmem [thread:$0]  %s4, 2048, %s70, [#allocation13], 128, 128, 8
    $region21: #{tpu_custom_call.1} parent=1 // pred_fallthru
      _
    // Predicated region
    $region22: #{tpu_custom_call.1} parent=1 // pred_check
      _
    $region23: #{tpu_custom_call.1} parent=1 // pred_check_branch
      %77 = sbr.rel (0) target = $region25
    $region24: #{tpu_custom_call.1} parent=1 // pred_region
      %s79 = ssub.s32 2048, 2048
      %80 = vsyncadd [#allocation16], %s79
      %s81 = sshll.u32 [#allocation15], 4
      %s82 = int_to_ptr.vmem [resolvable:$true] %s81
      %87 = dma.hbm_to_vmem [thread:$0]  %s5, 2048, %s82, [#allocation16], 128, 128, 8
    $region25: #{tpu_custom_call.1} parent=1 // pred_fallthru
      _
    // Predicated region
    $region26: #{tpu_custom_call.1} parent=1 // pred_check
      _
    $region27: #{tpu_custom_call.1} parent=1 // pred_check_branch
      %89 = sbr.rel (0) target = $region29
    $region28: #{tpu_custom_call.1} parent=1 // pred_region
      %90 = dma.done [#allocation7], 1024
    $region29: #{tpu_custom_call.1} parent=1 // pred_fallthru
      _
    // Predicated region
    $region30: #{tpu_custom_call.1} parent=1 // pred_check
      _
    $region31: #{tpu_custom_call.1} parent=1 // pred_check_branch
      %92 = sbr.rel (0) target = $region33
    $region32: #{tpu_custom_call.1} parent=1 // pred_region
      %93 = dma.done [#allocation10], 2048
    $region33: #{tpu_custom_call.1} parent=1 // pred_fallthru
      _
    // Predicated region
    $region34: #{tpu_custom_call.1} parent=1 // pred_check
      _
    $region35: #{tpu_custom_call.1} parent=1 // pred_check_branch
      %95 = sbr.rel (0) target = $region37
    $region36: #{tpu_custom_call.1} parent=1 // pred_region
      %96 = dma.done [#allocation10], 4096
    $region37: #{tpu_custom_call.1} parent=1 // pred_fallthru
      _
    // Predicated region
    $region38: #{tpu_custom_call.1} parent=1 // pred_check
      _
    $region39: #{tpu_custom_call.1} parent=1 // pred_check_branch
      %98 = sbr.rel (0) target = $region41
    $region40: #{tpu_custom_call.1} parent=1 // pred_region
      %99 = dma.done [#allocation13], 2048
    $region41: #{tpu_custom_call.1} parent=1 // pred_fallthru
      _
    // Predicated region
    $region42: #{tpu_custom_call.1} parent=1 // pred_check
      _
    $region43: #{tpu_custom_call.1} parent=1 // pred_check_branch
      %101 = sbr.rel (0) target = $region45
    $region44: #{tpu_custom_call.1} parent=1 // pred_region
      %102 = dma.done [#allocation13], 2048
    $region45: #{tpu_custom_call.1} parent=1 // pred_fallthru
      _
    // Predicated region
    $region46: #{tpu_custom_call.1} parent=1 // pred_check
      _
    $region47: #{tpu_custom_call.1} parent=1 // pred_check_branch
      %104 = sbr.rel (0) target = $region49
    $region48: #{tpu_custom_call.1} parent=1 // pred_region
      %105 = dma.done [#allocation16], 2048
    $region49: #{tpu_custom_call.1} parent=1 // pred_fallthru
      _
    %v106 = vld [vmem:[#allocation6] sm:$0xff]
    %v107 = vld [vmem:[#allocation6 + $0x8] sm:$0xff]
    %v108 = vld [vmem:[#allocation6 + $0x10] sm:$0xff]
    %v109 = vld [vmem:[#allocation6 + $0x18] sm:$0xff]
    %v110 = vld [vmem:[#allocation6 + $0x20] sm:$0xff]
    %v111 = vld [vmem:[#allocation6 + $0x28] sm:$0xff]
    %v112 = vld [vmem:[#allocation6 + $0x30] sm:$0xff]
    %v113 = vld [vmem:[#allocation6 + $0x38] sm:$0xff]
    %v114 = vld [vmem:[#allocation11] sm:$0xff]
    %v115 = vld [vmem:[#allocation11 + $0x8] sm:$0xff]
    %v116 = vld [vmem:[#allocation11 + $0x10] sm:$0xff]
    %v117 = vld [vmem:[#allocation11 + $0x18] sm:$0xff]
    %v118 = vld [vmem:[#allocation11 + $0x20] sm:$0xff]
    %v119 = vld [vmem:[#allocation11 + $0x28] sm:$0xff]
    %v120 = vld [vmem:[#allocation11 + $0x30] sm:$0xff]
    %v121 = vld [vmem:[#allocation11 + $0x38] sm:$0xff]
    %v122 = vld [vmem:[#allocation11 + $0x40] sm:$0xff]
    %v123 = vld [vmem:[#allocation11 + $0x48] sm:$0xff]
    %v124 = vld [vmem:[#allocation11 + $0x50] sm:$0xff]
    %v125 = vld [vmem:[#allocation11 + $0x58] sm:$0xff]
    %v126 = vld [vmem:[#allocation11 + $0x60] sm:$0xff]
    %v127 = vld [vmem:[#allocation11 + $0x68] sm:$0xff]
    %v128 = vld [vmem:[#allocation11 + $0x70] sm:$0xff]
    %v129 = vld [vmem:[#allocation11 + $0x78] sm:$0xff]
    %v130 = vld [vmem:[#allocation11 + $0x80] sm:$0xff]
    %v131 = vld [vmem:[#allocation11 + $0x88] sm:$0xff]
    %v132 = vld [vmem:[#allocation11 + $0x90] sm:$0xff]
    %v133 = vld [vmem:[#allocation11 + $0x98] sm:$0xff]
    %v134 = vld [vmem:[#allocation11 + $0xa0] sm:$0xff]
    %v135 = vld [vmem:[#allocation11 + $0xa8] sm:$0xff]
    %v136 = vld [vmem:[#allocation11 + $0xb0] sm:$0xff]
    %v137 = vld [vmem:[#allocation11 + $0xb8] sm:$0xff]
    %v138 = vld [vmem:[#allocation11 + $0xc0] sm:$0xff]
    %v139 = vld [vmem:[#allocation11 + $0xc8] sm:$0xff]
    %v140 = vld [vmem:[#allocation11 + $0xd0] sm:$0xff]
    %v141 = vld [vmem:[#allocation11 + $0xd8] sm:$0xff]
    %v142 = vld [vmem:[#allocation11 + $0xe0] sm:$0xff]
    %v143 = vld [vmem:[#allocation11 + $0xe8] sm:$0xff]
    %v144 = vld [vmem:[#allocation11 + $0xf0] sm:$0xff]
    %v145 = vld [vmem:[#allocation11 + $0xf8] sm:$0xff]
    %146 = vmatprep.subr.mxu0 %v115
    %147 = vmatpush1.msra.mxu0 %v114
    %148 = vmatprep.subr.mxu0 %v117
    %149 = vmatpush1.msra.mxu0 %v116
    %150 = vmatprep.subr.mxu0 %v119
    %151 = vmatpush1.msra.mxu0 %v118
    %152 = vmatprep.subr.mxu0 %v121
    %153 = vmatpush1.msra.mxu0 %v120
    %154 = vmatprep.subr.mxu0 %v123
    %155 = vmatpush1.msra.mxu0 %v122
    %156 = vmatprep.subr.mxu0 %v125
    %157 = vmatpush1.msra.mxu0 %v124
    %158 = vmatprep.subr.mxu0 %v127
    %159 = vmatpush1.msra.mxu0 %v126
    %160 = vmatprep.subr.mxu0 %v129
    %161 = vmatpush1.msra.mxu0 %v128
    %162 = vmatprep.subr.mxu0 %v131
    %163 = vmatpush1.msra.mxu0 %v130
    %164 = vmatprep.subr.mxu0 %v133
    %165 = vmatpush1.msra.mxu0 %v132
    %166 = vmatprep.subr.mxu0 %v135
    %167 = vmatpush1.msra.mxu0 %v134
    %168 = vmatprep.subr.mxu0 %v137
    %169 = vmatpush1.msra.mxu0 %v136
    %170 = vmatprep.subr.mxu0 %v139
    %171 = vmatpush1.msra.mxu0 %v138
    %172 = vmatprep.subr.mxu0 %v141
    %173 = vmatpush1.msra.mxu0 %v140
    %174 = vmatprep.subr.mxu0 %v143
    %175 = vmatpush1.msra.mxu0 %v142
    %176 = vmatprep.subr.mxu0 %v145
    %177 = vmatpush1.msra.mxu0 %v144
    %178 = vmatprep.subr.mxu0 0.0
    %179 = vmatpush1.msra.mxu0 0.0
    %180 = vmatprep.subr.mxu0 0.0
    %181 = vmatpush1.msra.mxu0 0.0
    %182 = vmatprep.subr.mxu0 0.0
    %183 = vmatpush1.msra.mxu0 0.0
    %184 = vmatprep.subr.mxu0 0.0
    %185 = vmatpush1.msra.mxu0 0.0
    %186 = vmatprep.subr.mxu0 0.0
    %187 = vmatpush1.msra.mxu0 0.0
    %188 = vmatprep.subr.mxu0 0.0
    %189 = vmatpush1.msra.mxu0 0.0
    %190 = vmatprep.subr.mxu0 0.0
    %191 = vmatpush1.msra.mxu0 0.0
    %192 = vmatprep.subr.mxu0 0.0
    %193 = vmatpush1.msra.mxu0 0.0
    %194 = vmatprep.subr.mxu0 0.0
    %195 = vmatpush1.msra.mxu0 0.0
    %196 = vmatprep.subr.mxu0 0.0
    %197 = vmatpush1.msra.mxu0 0.0
    %198 = vmatprep.subr.mxu0 0.0
    %199 = vmatpush1.msra.mxu0 0.0
    %200 = vmatprep.subr.mxu0 0.0
    %201 = vmatpush1.msra.mxu0 0.0
    %202 = vmatprep.subr.mxu0 0.0
    %203 = vmatpush1.msra.mxu0 0.0
    %204 = vmatprep.subr.mxu0 0.0
    %205 = vmatpush1.msra.mxu0 0.0
    %206 = vmatprep.subr.mxu0 0.0
    %207 = vmatpush1.msra.mxu0 0.0
    %208 = vmatprep.subr.mxu0 0.0
    %209 = vmatpush1.msra.mxu0 0.0
    %210 = vmatprep.mubr.f32.mxu0 0.0
    %211 = vmatmul.mubr.f32.gmra.mrb[0].mxu0 %v106
    %v212 = vpop.f32.mrb[0].mxu0
    %v213 = vadd.f32 0.0, %v212
    %v214 = vpop.f32.mrb[0].mxu0
    %v215 = vadd.f32 0.0, %v214
    %216 = vmatprep.mubr.f32.mxu0 0.0
    %217 = vmatmul.mubr.f32.gmra.mrb[0].mxu0 %v107
    %v218 = vpop.f32.mrb[0].mxu0
    %v219 = vadd.f32 0.0, %v218
    %v220 = vpop.f32.mrb[0].mxu0
    %v221 = vadd.f32 0.0, %v220
    %222 = vmatprep.mubr.f32.mxu0 0.0
    %223 = vmatmul.mubr.f32.gmra.mrb[0].mxu0 %v108
    %v224 = vpop.f32.mrb[0].mxu0
    %v225 = vadd.f32 0.0, %v224
    %v226 = vpop.f32.mrb[0].mxu0
    %v227 = vadd.f32 0.0, %v226
    %228 = vmatprep.mubr.f32.mxu0 0.0
    %229 = vmatmul.mubr.f32.gmra.mrb[0].mxu0 %v109
    %v230 = vpop.f32.mrb[0].mxu0
    %v231 = vadd.f32 0.0, %v230
    %v232 = vpop.f32.mrb[0].mxu0
    %v233 = vadd.f32 0.0, %v232
    %234 = vmatprep.mubr.f32.mxu0 0.0
    %235 = vmatmul.mubr.f32.gmra.mrb[0].mxu0 %v110
    %v236 = vpop.f32.mrb[0].mxu0
    %v237 = vadd.f32 0.0, %v236
    %v238 = vpop.f32.mrb[0].mxu0
    %v239 = vadd.f32 0.0, %v238
    %240 = vmatprep.mubr.f32.mxu0 0.0
    %241 = vmatmul.mubr.f32.gmra.mrb[0].mxu0 %v111
    %v242 = vpop.f32.mrb[0].mxu0
    %v243 = vadd.f32 0.0, %v242
    %v244 = vpop.f32.mrb[0].mxu0
    %v245 = vadd.f32 0.0, %v244
    %246 = vmatprep.mubr.f32.mxu0 0.0
    %247 = vmatmul.mubr.f32.gmra.mrb[0].mxu0 %v112
    %v248 = vpop.f32.mrb[0].mxu0
    %v249 = vadd.f32 0.0, %v248
    %v250 = vpop.f32.mrb[0].mxu0
    %v251 = vadd.f32 0.0, %v250
    %252 = vmatprep.mubr.f32.mxu0 0.0
    %253 = vmatmul.mubr.f32.gmra.mrb[0].mxu0 %v113
    %v254 = vpop.f32.mrb[0].mxu0
    %v255 = vadd.f32 0.0, %v254
    %v256 = vpop.f32.mrb[0].mxu0
    %v257 = vadd.f32 0.0, %v256
    %258 = vdwg.mxu0
    %v259 = vld [vmem:[#allocation15] sm:$0xff]
    %v260 = vld [vmem:[#allocation15 + $0x8] sm:$0xff]
    %v261 = vld [vmem:[#allocation15 + $0x10] sm:$0xff]
    %v262 = vld [vmem:[#allocation15 + $0x18] sm:$0xff]
    %v263 = vld [vmem:[#allocation15 + $0x20] sm:$0xff]
    %v264 = vld [vmem:[#allocation15 + $0x28] sm:$0xff]
    %v265 = vld [vmem:[#allocation15 + $0x30] sm:$0xff]
    %v266 = vld [vmem:[#allocation15 + $0x38] sm:$0xff]
    %v267 = vld [vmem:[#allocation15 + $0x40] sm:$0xff]
    %v268 = vld [vmem:[#allocation15 + $0x48] sm:$0xff]
    %v269 = vld [vmem:[#allocation15 + $0x50] sm:$0xff]
    %v270 = vld [vmem:[#allocation15 + $0x58] sm:$0xff]
    %v271 = vld [vmem:[#allocation15 + $0x60] sm:$0xff]
    %v272 = vld [vmem:[#allocation15 + $0x68] sm:$0xff]
    %v273 = vld [vmem:[#allocation15 + $0x70] sm:$0xff]
    %v274 = vld [vmem:[#allocation15 + $0x78] sm:$0xff]
    %275 = vst [vmem:[#allocation2] sm:$0xff] %v213
    %276 = vst [vmem:[#allocation2 + $0x8] sm:$0xff] %v219
    %277 = vst [vmem:[#allocation2 + $0x10] sm:$0xff] %v225
    %278 = vst [vmem:[#allocation2 + $0x18] sm:$0xff] %v231
    %279 = vst [vmem:[#allocation2 + $0x20] sm:$0xff] %v237
    %280 = vst [vmem:[#allocation2 + $0x28] sm:$0xff] %v243
    %281 = vst [vmem:[#allocation2 + $0x30] sm:$0xff] %v249
    %282 = vst [vmem:[#allocation2 + $0x38] sm:$0xff] %v255
    %283 = vst [vmem:[#allocation3] sm:$0xff] %v215
    %284 = vst [vmem:[#allocation3 + $0x8] sm:$0xff] %v221
    %285 = vst [vmem:[#allocation3 + $0x10] sm:$0xff] %v227
    %286 = vst [vmem:[#allocation3 + $0x18] sm:$0xff] %v233
    %287 = vst [vmem:[#allocation3 + $0x20] sm:$0xff] %v239
    %288 = vst [vmem:[#allocation3 + $0x28] sm:$0xff] %v245
    %289 = vst [vmem:[#allocation3 + $0x30] sm:$0xff] %v251
    %290 = vst [vmem:[#allocation3 + $0x38] sm:$0xff] %v257
    %v291 = vld [vmem:[#allocation9] sm:$0xff]
    %v292 = vld [vmem:[#allocation9 + $0x8] sm:$0xff]
    %v293 = vld [vmem:[#allocation2] sm:$0xff]
    %v294 = vld [vmem:[#allocation2 + $0x8] sm:$0xff]
    %v295 = vld [vmem:[#allocation2 + $0x10] sm:$0xff]
    %v296 = vld [vmem:[#allocation2 + $0x18] sm:$0xff]
    %v297 = vld [vmem:[#allocation2 + $0x20] sm:$0xff]
    %v298 = vld [vmem:[#allocation2 + $0x28] sm:$0xff]
    %v299 = vld [vmem:[#allocation2 + $0x30] sm:$0xff]
    %v300 = vld [vmem:[#allocation3] sm:$0xff]
    %v301 = vld [vmem:[#allocation3 + $0x8] sm:$0xff]
    %v302 = vld [vmem:[#allocation3 + $0x10] sm:$0xff]
    %v303 = vld [vmem:[#allocation3 + $0x18] sm:$0xff]
    %v304 = vld [vmem:[#allocation3 + $0x20] sm:$0xff]
    %v305 = vld [vmem:[#allocation3 + $0x28] sm:$0xff]
    %v306 = vld [vmem:[#allocation3 + $0x30] sm:$0xff]
    %s307 = scalar_lea.vmem [#allocation2], 8
    %v308 = vld [vmem:[%s307] sm:$0xff]
    %v309 = vld [vmem:[%s307 + $0x8] sm:$0xff]
    %v310 = vld [vmem:[%s307 + $0x10] sm:$0xff]
    %v311 = vld [vmem:[%s307 + $0x18] sm:$0xff]
    %v312 = vld [vmem:[%s307 + $0x20] sm:$0xff]
    %v313 = vld [vmem:[%s307 + $0x28] sm:$0xff]
    %v314 = vld [vmem:[%s307 + $0x30] sm:$0xff]
    %s315 = scalar_lea.vmem [#allocation3], 8
    %v316 = vld [vmem:[%s315] sm:$0xff]
    %v317 = vld [vmem:[%s315 + $0x8] sm:$0xff]
    %v318 = vld [vmem:[%s315 + $0x10] sm:$0xff]
    %v319 = vld [vmem:[%s315 + $0x18] sm:$0xff]
    %v320 = vld [vmem:[%s315 + $0x20] sm:$0xff]
    %v321 = vld [vmem:[%s315 + $0x28] sm:$0xff]
    %v322 = vld [vmem:[%s315 + $0x30] sm:$0xff]
    %v323 = vmul.f32 %v291, %v293
    %v324 = vmul.f32 %v291, %v294
    %v325 = vmul.f32 %v291, %v295
    %v326 = vmul.f32 %v291, %v296
    %v327 = vmul.f32 %v291, %v297
    %v328 = vmul.f32 %v291, %v298
    %v329 = vmul.f32 %v291, %v299
    %v330 = vadd.f32 %v308, %v323
    %v331 = vadd.f32 %v309, %v324
    %v332 = vadd.f32 %v310, %v325
    %v333 = vadd.f32 %v311, %v326
    %v334 = vadd.f32 %v312, %v327
    %v335 = vadd.f32 %v313, %v328
    %v336 = vadd.f32 %v314, %v329
    %v337 = vmul.f32 %v292, %v300
    %v338 = vmul.f32 %v292, %v301
    %v339 = vmul.f32 %v292, %v302
    %v340 = vmul.f32 %v292, %v303
    %v341 = vmul.f32 %v292, %v304
    %v342 = vmul.f32 %v292, %v305
    %v343 = vmul.f32 %v292, %v306
    %v344 = vsub.f32 %v330, %v337
    %v345 = vsub.f32 %v331, %v338
    %v346 = vsub.f32 %v332, %v339
    %v347 = vsub.f32 %v333, %v340
    %v348 = vsub.f32 %v334, %v341
    %v349 = vsub.f32 %v335, %v342
    %v350 = vsub.f32 %v336, %v343
    %351 = vst [vmem:[%s307] sm:$0xff] %v344
    %352 = vst [vmem:[%s307 + $0x8] sm:$0xff] %v345
    %353 = vst [vmem:[%s307 + $0x10] sm:$0xff] %v346
    %354 = vst [vmem:[%s307 + $0x18] sm:$0xff] %v347
    %355 = vst [vmem:[%s307 + $0x20] sm:$0xff] %v348
    %356 = vst [vmem:[%s307 + $0x28] sm:$0xff] %v349
    %357 = vst [vmem:[%s307 + $0x30] sm:$0xff] %v350
    %v358 = vmul.f32 %v291, %v300
    %v359 = vmul.f32 %v291, %v301
    %v360 = vmul.f32 %v291, %v302
    %v361 = vmul.f32 %v291, %v303
    %v362 = vmul.f32 %v291, %v304
    %v363 = vmul.f32 %v291, %v305
    %v364 = vmul.f32 %v291, %v306
    %v365 = vadd.f32 %v316, %v358
    %v366 = vadd.f32 %v317, %v359
    %v367 = vadd.f32 %v318, %v360
    %v368 = vadd.f32 %v319, %v361
    %v369 = vadd.f32 %v320, %v362
    %v370 = vadd.f32 %v321, %v363
    %v371 = vadd.f32 %v322, %v364
    %v372 = vmul.f32 %v292, %v293
    %v373 = vmul.f32 %v292, %v294
    %v374 = vmul.f32 %v292, %v295
    %v375 = vmul.f32 %v292, %v296
    %v376 = vmul.f32 %v292, %v297
    %v377 = vmul.f32 %v292, %v298
    %v378 = vmul.f32 %v292, %v299
    %v379 = vadd.f32 %v365, %v372
    %v380 = vadd.f32 %v366, %v373
    %v381 = vadd.f32 %v367, %v374
    %v382 = vadd.f32 %v368, %v375
    %v383 = vadd.f32 %v369, %v376
    %v384 = vadd.f32 %v370, %v377
    %v385 = vadd.f32 %v371, %v378
    %386 = vst [vmem:[%s315] sm:$0xff] %v379
    %387 = vst [vmem:[%s315 + $0x8] sm:$0xff] %v380
    %388 = vst [vmem:[%s315 + $0x10] sm:$0xff] %v381
    %389 = vst [vmem:[%s315 + $0x18] sm:$0xff] %v382
    %390 = vst [vmem:[%s315 + $0x20] sm:$0xff] %v383
    %391 = vst [vmem:[%s315 + $0x28] sm:$0xff] %v384
    %392 = vst [vmem:[%s315 + $0x30] sm:$0xff] %v385
    %s393 = scalar_lea.vmem [#allocation9], 16
    %v394 = vld [vmem:[%s393] sm:$0xff]
    %v395 = vld [vmem:[%s393 + $0x8] sm:$0xff]
    %v396 = vld [vmem:[#allocation2] sm:$0xff]
    %v397 = vld [vmem:[#allocation2 + $0x8] sm:$0xff]
    %v398 = vld [vmem:[#allocation2 + $0x10] sm:$0xff]
    %v399 = vld [vmem:[#allocation2 + $0x18] sm:$0xff]
    %v400 = vld [vmem:[#allocation2 + $0x20] sm:$0xff]
    %v401 = vld [vmem:[#allocation2 + $0x28] sm:$0xff]
    %v402 = vld [vmem:[#allocation3] sm:$0xff]
    %v403 = vld [vmem:[#allocation3 + $0x8] sm:$0xff]
    %v404 = vld [vmem:[#allocation3 + $0x10] sm:$0xff]
    %v405 = vld [vmem:[#allocation3 + $0x18] sm:$0xff]
    %v406 = vld [vmem:[#allocation3 + $0x20] sm:$0xff]
    %v407 = vld [vmem:[#allocation3 + $0x28] sm:$0xff]
    %s408 = scalar_lea.vmem [#allocation2], 16
    %v409 = vld [vmem:[%s408] sm:$0xff]
    %v410 = vld [vmem:[%s408 + $0x8] sm:$0xff]
    %v411 = vld [vmem:[%s408 + $0x10] sm:$0xff]
    %v412 = vld [vmem:[%s408 + $0x18] sm:$0xff]
    %v413 = vld [vmem:[%s408 + $0x20] sm:$0xff]
    %v414 = vld [vmem:[%s408 + $0x28] sm:$0xff]
    %s415 = scalar_lea.vmem [#allocation3], 16
    %v416 = vld [vmem:[%s415] sm:$0xff]
    %v417 = vld [vmem:[%s415 + $0x8] sm:$0xff]
    %v418 = vld [vmem:[%s415 + $0x10] sm:$0xff]
    %v419 = vld [vmem:[%s415 + $0x18] sm:$0xff]
    %v420 = vld [vmem:[%s415 + $0x20] sm:$0xff]
    %v421 = vld [vmem:[%s415 + $0x28] sm:$0xff]
    %v422 = vmul.f32 %v394, %v396
    %v423 = vmul.f32 %v394, %v397
    %v424 = vmul.f32 %v394, %v398
    %v425 = vmul.f32 %v394, %v399
    %v426 = vmul.f32 %v394, %v400
    %v427 = vmul.f32 %v394, %v401
    %v428 = vadd.f32 %v409, %v422
    %v429 = vadd.f32 %v410, %v423
    %v430 = vadd.f32 %v411, %v424
    %v431 = vadd.f32 %v412, %v425
    %v432 = vadd.f32 %v413, %v426
    %v433 = vadd.f32 %v414, %v427
    %v434 = vmul.f32 %v395, %v402
    %v435 = vmul.f32 %v395, %v403
    %v436 = vmul.f32 %v395, %v404
    %v437 = vmul.f32 %v395, %v405
    %v438 = vmul.f32 %v395, %v406
    %v439 = vmul.f32 %v395, %v407
    %v440 = vsub.f32 %v428, %v434
    %v441 = vsub.f32 %v429, %v435
    %v442 = vsub.f32 %v430, %v436
    %v443 = vsub.f32 %v431, %v437
    %v444 = vsub.f32 %v432, %v438
    %v445 = vsub.f32 %v433, %v439
    %446 = vst [vmem:[%s408] sm:$0xff] %v440
    %447 = vst [vmem:[%s408 + $0x8] sm:$0xff] %v441
    %448 = vst [vmem:[%s408 + $0x10] sm:$0xff] %v442
    %449 = vst [vmem:[%s408 + $0x18] sm:$0xff] %v443
    %450 = vst [vmem:[%s408 + $0x20] sm:$0xff] %v444
    %451 = vst [vmem:[%s408 + $0x28] sm:$0xff] %v445
    %v452 = vmul.f32 %v394, %v402
    %v453 = vmul.f32 %v394, %v403
    %v454 = vmul.f32 %v394, %v404
    %v455 = vmul.f32 %v394, %v405
    %v456 = vmul.f32 %v394, %v406
    %v457 = vmul.f32 %v394, %v407
    %v458 = vadd.f32 %v416, %v452
    %v459 = vadd.f32 %v417, %v453
    %v460 = vadd.f32 %v418, %v454
    %v461 = vadd.f32 %v419, %v455
    %v462 = vadd.f32 %v420, %v456
    %v463 = vadd.f32 %v421, %v457
    %v464 = vmul.f32 %v395, %v396
    %v465 = vmul.f32 %v395, %v397
    %v466 = vmul.f32 %v395, %v398
    %v467 = vmul.f32 %v395, %v399
    %v468 = vmul.f32 %v395, %v400
    %v469 = vmul.f32 %v395, %v401
    %v470 = vadd.f32 %v458, %v464
    %v471 = vadd.f32 %v459, %v465
    %v472 = vadd.f32 %v460, %v466
    %v473 = vadd.f32 %v461, %v467
    %v474 = vadd.f32 %v462, %v468
    %v475 = vadd.f32 %v463, %v469
    %476 = vst [vmem:[%s415] sm:$0xff] %v470
    %477 = vst [vmem:[%s415 + $0x8] sm:$0xff] %v471
    %478 = vst [vmem:[%s415 + $0x10] sm:$0xff] %v472
    %479 = vst [vmem:[%s415 + $0x18] sm:$0xff] %v473
    %480 = vst [vmem:[%s415 + $0x20] sm:$0xff] %v474
    %481 = vst [vmem:[%s415 + $0x28] sm:$0xff] %v475
    %s482 = scalar_lea.vmem [#allocation9], 48
    %v483 = vld [vmem:[%s482] sm:$0xff]
    %v484 = vld [vmem:[%s482 + $0x8] sm:$0xff]
    %v485 = vld [vmem:[#allocation2] sm:$0xff]
    %v486 = vld [vmem:[#allocation2 + $0x8] sm:$0xff]
    %v487 = vld [vmem:[#allocation2 + $0x10] sm:$0xff]
    %v488 = vld [vmem:[#allocation2 + $0x18] sm:$0xff]
    %v489 = vld [vmem:[#allocation3] sm:$0xff]
    %v490 = vld [vmem:[#allocation3 + $0x8] sm:$0xff]
    %v491 = vld [vmem:[#allocation3 + $0x10] sm:$0xff]
    %v492 = vld [vmem:[#allocation3 + $0x18] sm:$0xff]
    %s493 = scalar_lea.vmem [#allocation2], 32
    %v494 = vld [vmem:[%s493] sm:$0xff]
    %v495 = vld [vmem:[%s493 + $0x8] sm:$0xff]
    %v496 = vld [vmem:[%s493 + $0x10] sm:$0xff]
    %v497 = vld [vmem:[%s493 + $0x18] sm:$0xff]
    %s498 = scalar_lea.vmem [#allocation3], 32
    %v499 = vld [vmem:[%s498] sm:$0xff]
    %v500 = vld [vmem:[%s498 + $0x8] sm:$0xff]
    %v501 = vld [vmem:[%s498 + $0x10] sm:$0xff]
    %v502 = vld [vmem:[%s498 + $0x18] sm:$0xff]
    %v503 = vmul.f32 %v483, %v485
    %v504 = vmul.f32 %v483, %v486
    %v505 = vmul.f32 %v483, %v487
    %v506 = vmul.f32 %v483, %v488
    %v507 = vadd.f32 %v494, %v503
    %v508 = vadd.f32 %v495, %v504
    %v509 = vadd.f32 %v496, %v505
    %v510 = vadd.f32 %v497, %v506
    %v511 = vmul.f32 %v484, %v489
    %v512 = vmul.f32 %v484, %v490
    %v513 = vmul.f32 %v484, %v491
    %v514 = vmul.f32 %v484, %v492
    %v515 = vsub.f32 %v507, %v511
    %v516 = vsub.f32 %v508, %v512
    %v517 = vsub.f32 %v509, %v513
    %v518 = vsub.f32 %v510, %v514
    %519 = vst [vmem:[%s493] sm:$0xff] %v515
    %520 = vst [vmem:[%s493 + $0x8] sm:$0xff] %v516
    %521 = vst [vmem:[%s493 + $0x10] sm:$0xff] %v517
    %522 = vst [vmem:[%s493 + $0x18] sm:$0xff] %v518
    %v523 = vmul.f32 %v483, %v489
    %v524 = vmul.f32 %v483, %v490
    %v525 = vmul.f32 %v483, %v491
    %v526 = vmul.f32 %v483, %v492
    %v527 = vadd.f32 %v499, %v523
    %v528 = vadd.f32 %v500, %v524
    %v529 = vadd.f32 %v501, %v525
    %v530 = vadd.f32 %v502, %v526
    %v531 = vmul.f32 %v484, %v485
    %v532 = vmul.f32 %v484, %v486
    %v533 = vmul.f32 %v484, %v487
    %v534 = vmul.f32 %v484, %v488
    %v535 = vadd.f32 %v527, %v531
    %v536 = vadd.f32 %v528, %v532
    %v537 = vadd.f32 %v529, %v533
    %v538 = vadd.f32 %v530, %v534
    %539 = vst [vmem:[%s498] sm:$0xff] %v535
    %540 = vst [vmem:[%s498 + $0x8] sm:$0xff] %v536
    %541 = vst [vmem:[%s498 + $0x10] sm:$0xff] %v537
    %542 = vst [vmem:[%s498 + $0x18] sm:$0xff] %v538
    %p543 = scmp.ne.s32.totalorder 0, 0
    // Predicated region
    $region50: #{tpu_custom_call.1} parent=1 // pred_check
      %p544 = pneg %p543
    $region51: #{tpu_custom_call.1} parent=1 // pred_check_branch
      %546 = sbr.rel (%p544) target = $region53
    $region52: #{tpu_custom_call.1} parent=1 // pred_region
      %v547 = vld [vmem:[#allocation9] sm:$0xff]
      %v548 = vld [vmem:[#allocation9 + $0x8] sm:$0xff]
      %v549 = vld [vmem:[#allocation9 + $0x10] sm:$0xff]
      %v550 = vld [vmem:[#allocation9 + $0x18] sm:$0xff]
      %v551 = vld [vmem:[#allocation9 + $0x20] sm:$0xff]
      %v552 = vld [vmem:[#allocation9 + $0x28] sm:$0xff]
      %v553 = vld [vmem:[#allocation9 + $0x30] sm:$0xff]
      %v554 = vld [vmem:[#allocation9 + $0x38] sm:$0xff]
      %v555 = vld [vmem:[#allocation9 + $0x40] sm:$0xff]
      %v556 = vld [vmem:[#allocation9 + $0x48] sm:$0xff]
      %v557 = vld [vmem:[#allocation9 + $0x50] sm:$0xff]
      %v558 = vld [vmem:[#allocation9 + $0x58] sm:$0xff]
      %v559 = vld [vmem:[#allocation9 + $0x60] sm:$0xff]
      %v560 = vld [vmem:[#allocation9 + $0x68] sm:$0xff]
      %v561 = vld [vmem:[#allocation9 + $0x70] sm:$0xff]
      %v562 = vld [vmem:[#allocation9 + $0x78] sm:$0xff]
      %v563 = vld [vmem:[#allocation4] sm:$0xff]
      %v564 = vld [vmem:[#allocation5] sm:$0xff]
      %v565 = vld [vmem:[#allocation2] sm:$0xff]
      %v566 = vld [vmem:[#allocation2 + $0x8] sm:$0xff]
      %v567 = vld [vmem:[#allocation2 + $0x10] sm:$0xff]
      %v568 = vld [vmem:[#allocation2 + $0x18] sm:$0xff]
      %v569 = vld [vmem:[#allocation2 + $0x20] sm:$0xff]
      %v570 = vld [vmem:[#allocation2 + $0x28] sm:$0xff]
      %v571 = vld [vmem:[#allocation2 + $0x30] sm:$0xff]
      %v572 = vld [vmem:[#allocation2 + $0x38] sm:$0xff]
      %v573 = vmul.f32 %v547, %v563
      %v574 = vmul.f32 %v549, %v563
      %v575 = vmul.f32 %v551, %v563
      %v576 = vmul.f32 %v553, %v563
      %v577 = vmul.f32 %v555, %v563
      %v578 = vmul.f32 %v557, %v563
      %v579 = vmul.f32 %v559, %v563
      %v580 = vmul.f32 %v561, %v563
      %v581 = vadd.f32 %v565, %v573
      %v582 = vadd.f32 %v566, %v574
      %v583 = vadd.f32 %v567, %v575
      %v584 = vadd.f32 %v568, %v576
      %v585 = vadd.f32 %v569, %v577
      %v586 = vadd.f32 %v570, %v578
      %v587 = vadd.f32 %v571, %v579
      %v588 = vadd.f32 %v572, %v580
      %v589 = vmul.f32 %v548, %v564
      %v590 = vmul.f32 %v550, %v564
      %v591 = vmul.f32 %v552, %v564
      %v592 = vmul.f32 %v554, %v564
      %v593 = vmul.f32 %v556, %v564
      %v594 = vmul.f32 %v558, %v564
      %v595 = vmul.f32 %v560, %v564
      %v596 = vmul.f32 %v562, %v564
      %v597 = vsub.f32 %v581, %v589
      %v598 = vsub.f32 %v582, %v590
      %v599 = vsub.f32 %v583, %v591
      %v600 = vsub.f32 %v584, %v592
      %v601 = vsub.f32 %v585, %v593
      %v602 = vsub.f32 %v586, %v594
      %v603 = vsub.f32 %v587, %v595
      %v604 = vsub.f32 %v588, %v596
      %605 = vst [vmem:[#allocation2] sm:$0xff] %v597
      %606 = vst [vmem:[#allocation2 + $0x8] sm:$0xff] %v598
      %607 = vst [vmem:[#allocation2 + $0x10] sm:$0xff] %v599
      %608 = vst [vmem:[#allocation2 + $0x18] sm:$0xff] %v600
      %609 = vst [vmem:[#allocation2 + $0x20] sm:$0xff] %v601
      %610 = vst [vmem:[#allocation2 + $0x28] sm:$0xff] %v602
      %611 = vst [vmem:[#allocation2 + $0x30] sm:$0xff] %v603
      %612 = vst [vmem:[#allocation2 + $0x38] sm:$0xff] %v604
      %v613 = vld [vmem:[#allocation3] sm:$0xff]
      %v614 = vld [vmem:[#allocation3 + $0x8] sm:$0xff]
      %v615 = vld [vmem:[#allocation3 + $0x10] sm:$0xff]
      %v616 = vld [vmem:[#allocation3 + $0x18] sm:$0xff]
      %v617 = vld [vmem:[#allocation3 + $0x20] sm:$0xff]
      %v618 = vld [vmem:[#allocation3 + $0x28] sm:$0xff]
      %v619 = vld [vmem:[#allocation3 + $0x30] sm:$0xff]
      %v620 = vld [vmem:[#allocation3 + $0x38] sm:$0xff]
      %v621 = vmul.f32 %v547, %v564
      %v622 = vmul.f32 %v549, %v564
      %v623 = vmul.f32 %v551, %v564
      %v624 = vmul.f32 %v553, %v564
      %v625 = vmul.f32 %v555, %v564
      %v626 = vmul.f32 %v557, %v564
      %v627 = vmul.f32 %v559, %v564
      %v628 = vmul.f32 %v561, %v564
      %v629 = vadd.f32 %v613, %v621
      %v630 = vadd.f32 %v614, %v622
      %v631 = vadd.f32 %v615, %v623
      %v632 = vadd.f32 %v616, %v624
      %v633 = vadd.f32 %v617, %v625
      %v634 = vadd.f32 %v618, %v626
      %v635 = vadd.f32 %v619, %v627
      %v636 = vadd.f32 %v620, %v628
      %v637 = vmul.f32 %v548, %v563
      %v638 = vmul.f32 %v550, %v563
      %v639 = vmul.f32 %v552, %v563
      %v640 = vmul.f32 %v554, %v563
      %v641 = vmul.f32 %v556, %v563
      %v642 = vmul.f32 %v558, %v563
      %v643 = vmul.f32 %v560, %v563
      %v644 = vmul.f32 %v562, %v563
      %v645 = vadd.f32 %v629, %v637
      %v646 = vadd.f32 %v630, %v638
      %v647 = vadd.f32 %v631, %v639
      %v648 = vadd.f32 %v632, %v640
      %v649 = vadd.f32 %v633, %v641
      %v650 = vadd.f32 %v634, %v642
      %v651 = vadd.f32 %v635, %v643
      %v652 = vadd.f32 %v636, %v644
      %653 = vst [vmem:[#allocation3] sm:$0xff] %v645
      %654 = vst [vmem:[#allocation3 + $0x8] sm:$0xff] %v646
      %655 = vst [vmem:[#allocation3 + $0x10] sm:$0xff] %v647
      %656 = vst [vmem:[#allocation3 + $0x18] sm:$0xff] %v648
      %657 = vst [vmem:[#allocation3 + $0x20] sm:$0xff] %v649
      %658 = vst [vmem:[#allocation3 + $0x28] sm:$0xff] %v650
      %659 = vst [vmem:[#allocation3 + $0x30] sm:$0xff] %v651
      %660 = vst [vmem:[#allocation3 + $0x38] sm:$0xff] %v652
    $region53: #{tpu_custom_call.1} parent=1 // pred_fallthru
      _
    %s661 = scalar_lea.vmem [#allocation2], 56
    %v662 = vld [vmem:[%s661] sm:$0xff]
    %663 = vst [vmem:[#allocation4] sm:$0xff] %v662
    %s664 = scalar_lea.vmem [#allocation3], 56
    %v665 = vld [vmem:[%s664] sm:$0xff]
    %666 = vst [vmem:[#allocation5] sm:$0xff] %v665
    %v667 = vld [vmem:[#allocation2] sm:$0xff]
    %v668 = vld [vmem:[#allocation2 + $0x8] sm:$0xff]
    %v669 = vld [vmem:[#allocation2 + $0x10] sm:$0xff]
    %v670 = vld [vmem:[#allocation2 + $0x18] sm:$0xff]
    %v671 = vld [vmem:[#allocation2 + $0x20] sm:$0xff]
    %v672 = vld [vmem:[#allocation2 + $0x28] sm:$0xff]
    %v673 = vld [vmem:[#allocation2 + $0x30] sm:$0xff]
    %v674 = vld [vmem:[#allocation2 + $0x38] sm:$0xff]
    %v675 = vld [vmem:[#allocation3] sm:$0xff]
    %v676 = vld [vmem:[#allocation3 + $0x8] sm:$0xff]
    %v677 = vld [vmem:[#allocation3 + $0x10] sm:$0xff]
    %v678 = vld [vmem:[#allocation3 + $0x18] sm:$0xff]
    %v679 = vld [vmem:[#allocation3 + $0x20] sm:$0xff]
    %v680 = vld [vmem:[#allocation3 + $0x28] sm:$0xff]
    %v681 = vld [vmem:[#allocation3 + $0x30] sm:$0xff]
    %v682 = vld [vmem:[#allocation3 + $0x38] sm:$0xff]
    %v683 = vld [vmem:[#allocation12] sm:$0xff]
    %v684 = vld [vmem:[#allocation12 + $0x8] sm:$0xff]
    %v685 = vld [vmem:[#allocation12 + $0x10] sm:$0xff]
    %v686 = vld [vmem:[#allocation12 + $0x18] sm:$0xff]
    %v687 = vld [vmem:[#allocation12 + $0x20] sm:$0xff]
    %v688 = vld [vmem:[#allocation12 + $0x28] sm:$0xff]
    %v689 = vld [vmem:[#allocation12 + $0x30] sm:$0xff]
    %v690 = vld [vmem:[#allocation12 + $0x38] sm:$0xff]
    %v691 = vld [vmem:[#allocation12 + $0x40] sm:$0xff]
    %v692 = vld [vmem:[#allocation12 + $0x48] sm:$0xff]
    %v693 = vld [vmem:[#allocation12 + $0x50] sm:$0xff]
    %v694 = vld [vmem:[#allocation12 + $0x58] sm:$0xff]
    %v695 = vld [vmem:[#allocation12 + $0x60] sm:$0xff]
    %v696 = vld [vmem:[#allocation12 + $0x68] sm:$0xff]
    %v697 = vld [vmem:[#allocation12 + $0x70] sm:$0xff]
    %v698 = vld [vmem:[#allocation12 + $0x78] sm:$0xff]
    %699 = vmatprep.subr.mxu0 0.0
    %700 = vmatpush1.msra.mxu0 %v683
    %701 = vmatprep.subr.mxu0 0.0
    %702 = vmatpush1.msra.mxu0 %v684
    %703 = vmatprep.subr.mxu0 0.0
    %704 = vmatpush1.msra.mxu0 %v685
    %705 = vmatprep.subr.mxu0 0.0
    %706 = vmatpush1.msra.mxu0 %v686
    %707 = vmatprep.subr.mxu0 0.0
    %708 = vmatpush1.msra.mxu0 %v687
    %709 = vmatprep.subr.mxu0 0.0
    %710 = vmatpush1.msra.mxu0 %v688
    %711 = vmatprep.subr.mxu0 0.0
    %712 = vmatpush1.msra.mxu0 %v689
    %713 = vmatprep.subr.mxu0 0.0
    %714 = vmatpush1.msra.mxu0 %v690
    %715 = vmatprep.subr.mxu0 0.0
    %716 = vmatpush1.msra.mxu0 %v691
    %717 = vmatprep.subr.mxu0 0.0
    %718 = vmatpush1.msra.mxu0 %v692
    %719 = vmatprep.subr.mxu0 0.0
    %720 = vmatpush1.msra.mxu0 %v693
    %721 = vmatprep.subr.mxu0 0.0
    %722 = vmatpush1.msra.mxu0 %v694
    %723 = vmatprep.subr.mxu0 0.0
    %724 = vmatpush1.msra.mxu0 %v695
    %725 = vmatprep.subr.mxu0 0.0
    %726 = vmatpush1.msra.mxu0 %v696
    %727 = vmatprep.subr.mxu0 0.0
    %728 = vmatpush1.msra.mxu0 %v697
    %729 = vmatprep.subr.mxu0 0.0
    %730 = vmatpush1.msra.mxu0 %v698
    %731 = vmatprep.subr.mxu0 0.0
    %732 = vmatpush1.msra.mxu0 0.0
    %733 = vmatprep.subr.mxu0 0.0
    %734 = vmatpush1.msra.mxu0 0.0
    %735 = vmatprep.subr.mxu0 0.0
    %736 = vmatpush1.msra.mxu0 0.0
    %737 = vmatprep.subr.mxu0 0.0
    %738 = vmatpush1.msra.mxu0 0.0
    %739 = vmatprep.subr.mxu0 0.0
    %740 = vmatpush1.msra.mxu0 0.0
    %741 = vmatprep.subr.mxu0 0.0
    %742 = vmatpush1.msra.mxu0 0.0
    %743 = vmatprep.subr.mxu0 0.0
    %744 = vmatpush1.msra.mxu0 0.0
    %745 = vmatprep.subr.mxu0 0.0
    %746 = vmatpush1.msra.mxu0 0.0
    %747 = vmatprep.subr.mxu0 0.0
    %748 = vmatpush1.msra.mxu0 0.0
    %749 = vmatprep.subr.mxu0 0.0
    %750 = vmatpush1.msra.mxu0 0.0
    %751 = vmatprep.subr.mxu0 0.0
    %752 = vmatpush1.msra.mxu0 0.0
    %753 = vmatprep.subr.mxu0 0.0
    %754 = vmatpush1.msra.mxu0 0.0
    %755 = vmatprep.subr.mxu0 0.0
    %756 = vmatpush1.msra.mxu0 0.0
    %757 = vmatprep.subr.mxu0 0.0
    %758 = vmatpush1.msra.mxu0 0.0
    %759 = vmatprep.subr.mxu0 0.0
    %760 = vmatpush1.msra.mxu0 0.0
    %761 = vmatprep.subr.mxu0 0.0
    %762 = vmatpush1.msra.mxu0 0.0
    %763 = vmatprep.mubr.f32.mxu0 0.0
    %764 = vmatmul.mubr.f32.gmra.mrb[0].mxu0 %v667
    %v765 = vpop.f32.mrb[0].mxu0
    %v766 = vadd.f32 0.0, %v765
    %v767 = vpop.f32.mrb[0].mxu0
    %768 = vmatprep.mubr.f32.mxu0 0.0
    %769 = vmatmul.mubr.f32.gmra.mrb[0].mxu0 %v668
    %v770 = vpop.f32.mrb[0].mxu0
    %v771 = vadd.f32 0.0, %v770
    %v772 = vpop.f32.mrb[0].mxu0
    %773 = vmatprep.mubr.f32.mxu0 0.0
    %774 = vmatmul.mubr.f32.gmra.mrb[0].mxu0 %v669
    %v775 = vpop.f32.mrb[0].mxu0
    %v776 = vadd.f32 0.0, %v775
    %v777 = vpop.f32.mrb[0].mxu0
    %778 = vmatprep.mubr.f32.mxu0 0.0
    %779 = vmatmul.mubr.f32.gmra.mrb[0].mxu0 %v670
    %v780 = vpop.f32.mrb[0].mxu0
    %v781 = vadd.f32 0.0, %v780
    %v782 = vpop.f32.mrb[0].mxu0
    %783 = vmatprep.mubr.f32.mxu0 0.0
    %784 = vmatmul.mubr.f32.gmra.mrb[0].mxu0 %v671
    %v785 = vpop.f32.mrb[0].mxu0
    %v786 = vadd.f32 0.0, %v785
    %v787 = vpop.f32.mrb[0].mxu0
    %788 = vmatprep.mubr.f32.mxu0 0.0
    %789 = vmatmul.mubr.f32.gmra.mrb[0].mxu0 %v672
    %v790 = vpop.f32.mrb[0].mxu0
    %v791 = vadd.f32 0.0, %v790
    %v792 = vpop.f32.mrb[0].mxu0
    %793 = vmatprep.mubr.f32.mxu0 0.0
    %794 = vmatmul.mubr.f32.gmra.mrb[0].mxu0 %v673
    %v795 = vpop.f32.mrb[0].mxu0
    %v796 = vadd.f32 0.0, %v795
    %v797 = vpop.f32.mrb[0].mxu0
    %798 = vmatprep.mubr.f32.mxu0 0.0
    %799 = vmatmul.mubr.f32.gmra.mrb[0].mxu0 %v674
    %v800 = vpop.f32.mrb[0].mxu0
    %v801 = vadd.f32 0.0, %v800
    %v802 = vpop.f32.mrb[0].mxu0
    %803 = vdwg.mxu0
    %804 = vmatprep.subr.mxu0 0.0
    %805 = vmatpush1.msra.mxu0 %v259
    %806 = vmatprep.subr.mxu0 0.0
    %807 = vmatpush1.msra.mxu0 %v260
    %808 = vmatprep.subr.mxu0 0.0
    %809 = vmatpush1.msra.mxu0 %v261
    %810 = vmatprep.subr.mxu0 0.0
    %811 = vmatpush1.msra.mxu0 %v262
    %812 = vmatprep.subr.mxu0 0.0
    %813 = vmatpush1.msra.mxu0 %v263
    %814 = vmatprep.subr.mxu0 0.0
    %815 = vmatpush1.msra.mxu0 %v264
    %816 = vmatprep.subr.mxu0 0.0
    %817 = vmatpush1.msra.mxu0 %v265
    %818 = vmatprep.subr.mxu0 0.0
    %819 = vmatpush1.msra.mxu0 %v266
    %820 = vmatprep.subr.mxu0 0.0
    %821 = vmatpush1.msra.mxu0 %v267
    %822 = vmatprep.subr.mxu0 0.0
    %823 = vmatpush1.msra.mxu0 %v268
    %824 = vmatprep.subr.mxu0 0.0
    %825 = vmatpush1.msra.mxu0 %v269
    %826 = vmatprep.subr.mxu0 0.0
    %827 = vmatpush1.msra.mxu0 %v270
    %828 = vmatprep.subr.mxu0 0.0
    %829 = vmatpush1.msra.mxu0 %v271
    %830 = vmatprep.subr.mxu0 0.0
    %831 = vmatpush1.msra.mxu0 %v272
    %832 = vmatprep.subr.mxu0 0.0
    %833 = vmatpush1.msra.mxu0 %v273
    %834 = vmatprep.subr.mxu0 0.0
    %835 = vmatpush1.msra.mxu0 %v274
    %836 = vmatprep.subr.mxu0 0.0
    %837 = vmatpush1.msra.mxu0 0.0
    %838 = vmatprep.subr.mxu0 0.0
    %839 = vmatpush1.msra.mxu0 0.0
    %840 = vmatprep.subr.mxu0 0.0
    %841 = vmatpush1.msra.mxu0 0.0
    %842 = vmatprep.subr.mxu0 0.0
    %843 = vmatpush1.msra.mxu0 0.0
    %844 = vmatprep.subr.mxu0 0.0
    %845 = vmatpush1.msra.mxu0 0.0
    %846 = vmatprep.subr.mxu0 0.0
    %847 = vmatpush1.msra.mxu0 0.0
    %848 = vmatprep.subr.mxu0 0.0
    %849 = vmatpush1.msra.mxu0 0.0
    %850 = vmatprep.subr.mxu0 0.0
    %851 = vmatpush1.msra.mxu0 0.0
    %852 = vmatprep.subr.mxu0 0.0
    %853 = vmatpush1.msra.mxu0 0.0
    %854 = vmatprep.subr.mxu0 0.0
    %855 = vmatpush1.msra.mxu0 0.0
    %856 = vmatprep.subr.mxu0 0.0
    %857 = vmatpush1.msra.mxu0 0.0
    %858 = vmatprep.subr.mxu0 0.0
    %859 = vmatpush1.msra.mxu0 0.0
    %860 = vmatprep.subr.mxu0 0.0
    %861 = vmatpush1.msra.mxu0 0.0
    %862 = vmatprep.subr.mxu0 0.0
    %863 = vmatpush1.msra.mxu0 0.0
    %864 = vmatprep.subr.mxu0 0.0
    %865 = vmatpush1.msra.mxu0 0.0
    %866 = vmatprep.subr.mxu0 0.0
    %867 = vmatpush1.msra.mxu0 0.0
    %868 = vmatprep.mubr.f32.mxu0 0.0
    %869 = vmatmul.mubr.f32.gmra.mrb[0].mxu0 %v106
    %v870 = vpop.f32.mrb[0].mxu0
    %v871 = vadd.f32 %v766, %v870
    %v872 = vpop.f32.mrb[0].mxu0
    %873 = vmatprep.mubr.f32.mxu0 0.0
    %874 = vmatmul.mubr.f32.gmra.mrb[0].mxu0 %v107
    %v875 = vpop.f32.mrb[0].mxu0
    %v876 = vadd.f32 %v771, %v875
    %v877 = vpop.f32.mrb[0].mxu0
    %878 = vmatprep.mubr.f32.mxu0 0.0
    %879 = vmatmul.mubr.f32.gmra.mrb[0].mxu0 %v108
    %v880 = vpop.f32.mrb[0].mxu0
    %v881 = vadd.f32 %v776, %v880
    %v882 = vpop.f32.mrb[0].mxu0
    %883 = vmatprep.mubr.f32.mxu0 0.0
    %884 = vmatmul.mubr.f32.gmra.mrb[0].mxu0 %v109
    %v885 = vpop.f32.mrb[0].mxu0
    %v886 = vadd.f32 %v781, %v885
    %v887 = vpop.f32.mrb[0].mxu0
    %888 = vmatprep.mubr.f32.mxu0 0.0
    %889 = vmatmul.mubr.f32.gmra.mrb[0].mxu0 %v110
    %v890 = vpop.f32.mrb[0].mxu0
    %v891 = vadd.f32 %v786, %v890
    %v892 = vpop.f32.mrb[0].mxu0
    %893 = vmatprep.mubr.f32.mxu0 0.0
    %894 = vmatmul.mubr.f32.gmra.mrb[0].mxu0 %v111
    %v895 = vpop.f32.mrb[0].mxu0
    %v896 = vadd.f32 %v791, %v895
    %v897 = vpop.f32.mrb[0].mxu0
    %898 = vmatprep.mubr.f32.mxu0 0.0
    %899 = vmatmul.mubr.f32.gmra.mrb[0].mxu0 %v112
    %v900 = vpop.f32.mrb[0].mxu0
    %v901 = vadd.f32 %v796, %v900
    %v902 = vpop.f32.mrb[0].mxu0
    %903 = vmatprep.mubr.f32.mxu0 0.0
    %904 = vmatmul.mubr.f32.gmra.mrb[0].mxu0 %v113
    %v905 = vpop.f32.mrb[0].mxu0
    %v906 = vadd.f32 %v801, %v905
    %v907 = vpop.f32.mrb[0].mxu0
    %908 = vdwg.mxu0
    %v909 = vld [vmem:[#allocation14] sm:$0xff]
    %v910 = vld [vmem:[#allocation14 + $0x8] sm:$0xff]
    %v911 = vld [vmem:[#allocation14 + $0x10] sm:$0xff]
    %v912 = vld [vmem:[#allocation14 + $0x18] sm:$0xff]
    %v913 = vld [vmem:[#allocation14 + $0x20] sm:$0xff]
    %v914 = vld [vmem:[#allocation14 + $0x28] sm:$0xff]
    %v915 = vld [vmem:[#allocation14 + $0x30] sm:$0xff]
    %v916 = vld [vmem:[#allocation14 + $0x38] sm:$0xff]
    %v917 = vld [vmem:[#allocation14 + $0x40] sm:$0xff]
    %v918 = vld [vmem:[#allocation14 + $0x48] sm:$0xff]
    %v919 = vld [vmem:[#allocation14 + $0x50] sm:$0xff]
    %v920 = vld [vmem:[#allocation14 + $0x58] sm:$0xff]
    %v921 = vld [vmem:[#allocation14 + $0x60] sm:$0xff]
    %v922 = vld [vmem:[#allocation14 + $0x68] sm:$0xff]
    %v923 = vld [vmem:[#allocation14 + $0x70] sm:$0xff]
    %v924 = vld [vmem:[#allocation14 + $0x78] sm:$0xff]
    %925 = vmatprep.subr.mxu0 0.0
    %926 = vmatpush1.msra.mxu0 %v909
    %927 = vmatprep.subr.mxu0 0.0
    %928 = vmatpush1.msra.mxu0 %v910
    %929 = vmatprep.subr.mxu0 0.0
    %930 = vmatpush1.msra.mxu0 %v911
    %931 = vmatprep.subr.mxu0 0.0
    %932 = vmatpush1.msra.mxu0 %v912
    %933 = vmatprep.subr.mxu0 0.0
    %934 = vmatpush1.msra.mxu0 %v913
    %935 = vmatprep.subr.mxu0 0.0
    %936 = vmatpush1.msra.mxu0 %v914
    %937 = vmatprep.subr.mxu0 0.0
    %938 = vmatpush1.msra.mxu0 %v915
    %939 = vmatprep.subr.mxu0 0.0
    %940 = vmatpush1.msra.mxu0 %v916
    %941 = vmatprep.subr.mxu0 0.0
    %942 = vmatpush1.msra.mxu0 %v917
    %943 = vmatprep.subr.mxu0 0.0
    %944 = vmatpush1.msra.mxu0 %v918
    %945 = vmatprep.subr.mxu0 0.0
    %946 = vmatpush1.msra.mxu0 %v919
    %947 = vmatprep.subr.mxu0 0.0
    %948 = vmatpush1.msra.mxu0 %v920
    %949 = vmatprep.subr.mxu0 0.0
    %950 = vmatpush1.msra.mxu0 %v921
    %951 = vmatprep.subr.mxu0 0.0
    %952 = vmatpush1.msra.mxu0 %v922
    %953 = vmatprep.subr.mxu0 0.0
    %954 = vmatpush1.msra.mxu0 %v923
    %955 = vmatprep.subr.mxu0 0.0
    %956 = vmatpush1.msra.mxu0 %v924
    %957 = vmatprep.subr.mxu0 0.0
    %958 = vmatpush1.msra.mxu0 0.0
    %959 = vmatprep.subr.mxu0 0.0
    %960 = vmatpush1.msra.mxu0 0.0
    %961 = vmatprep.subr.mxu0 0.0
    %962 = vmatpush1.msra.mxu0 0.0
    %963 = vmatprep.subr.mxu0 0.0
    %964 = vmatpush1.msra.mxu0 0.0
    %965 = vmatprep.subr.mxu0 0.0
    %966 = vmatpush1.msra.mxu0 0.0
    %967 = vmatprep.subr.mxu0 0.0
    %968 = vmatpush1.msra.mxu0 0.0
    %969 = vmatprep.subr.mxu0 0.0
    %970 = vmatpush1.msra.mxu0 0.0
    %971 = vmatprep.subr.mxu0 0.0
    %972 = vmatpush1.msra.mxu0 0.0
    %973 = vmatprep.subr.mxu0 0.0
    %974 = vmatpush1.msra.mxu0 0.0
    %975 = vmatprep.subr.mxu0 0.0
    %976 = vmatpush1.msra.mxu0 0.0
    %977 = vmatprep.subr.mxu0 0.0
    %978 = vmatpush1.msra.mxu0 0.0
    %979 = vmatprep.subr.mxu0 0.0
    %980 = vmatpush1.msra.mxu0 0.0
    %981 = vmatprep.subr.mxu0 0.0
    %982 = vmatpush1.msra.mxu0 0.0
    %983 = vmatprep.subr.mxu0 0.0
    %984 = vmatpush1.msra.mxu0 0.0
    %985 = vmatprep.subr.mxu0 0.0
    %986 = vmatpush1.msra.mxu0 0.0
    %987 = vmatprep.subr.mxu0 0.0
    %988 = vmatpush1.msra.mxu0 0.0
    %989 = vmatprep.mubr.f32.mxu0 0.0
    %990 = vmatmul.mubr.f32.gmra.mrb[0].mxu0 %v675
    %v991 = vpop.f32.mrb[0].mxu0
    %v992 = vadd.f32 0.0, %v991
    %v993 = vpop.f32.mrb[0].mxu0
    %994 = vmatprep.mubr.f32.mxu0 0.0
    %995 = vmatmul.mubr.f32.gmra.mrb[0].mxu0 %v676
    %v996 = vpop.f32.mrb[0].mxu0
    %v997 = vadd.f32 0.0, %v996
    %v998 = vpop.f32.mrb[0].mxu0
    %999 = vmatprep.mubr.f32.mxu0 0.0
    %1000 = vmatmul.mubr.f32.gmra.mrb[0].mxu0 %v677
    %v1001 = vpop.f32.mrb[0].mxu0
    %v1002 = vadd.f32 0.0, %v1001
    %v1003 = vpop.f32.mrb[0].mxu0
    %1004 = vmatprep.mubr.f32.mxu0 0.0
    %1005 = vmatmul.mubr.f32.gmra.mrb[0].mxu0 %v678
    %v1006 = vpop.f32.mrb[0].mxu0
    %v1007 = vadd.f32 0.0, %v1006
    %v1008 = vpop.f32.mrb[0].mxu0
    %1009 = vmatprep.mubr.f32.mxu0 0.0
    %1010 = vmatmul.mubr.f32.gmra.mrb[0].mxu0 %v679
    %v1011 = vpop.f32.mrb[0].mxu0
    %v1012 = vadd.f32 0.0, %v1011
    %v1013 = vpop.f32.mrb[0].mxu0
    %1014 = vmatprep.mubr.f32.mxu0 0.0
    %1015 = vmatmul.mubr.f32.gmra.mrb[0].mxu0 %v680
    %v1016 = vpop.f32.mrb[0].mxu0
    %v1017 = vadd.f32 0.0, %v1016
    %v1018 = vpop.f32.mrb[0].mxu0
    %1019 = vmatprep.mubr.f32.mxu0 0.0
    %1020 = vmatmul.mubr.f32.gmra.mrb[0].mxu0 %v681
    %v1021 = vpop.f32.mrb[0].mxu0
    %v1022 = vadd.f32 0.0, %v1021
    %v1023 = vpop.f32.mrb[0].mxu0
    %1024 = vmatprep.mubr.f32.mxu0 0.0
    %1025 = vmatmul.mubr.f32.gmra.mrb[0].mxu0 %v682
    %v1026 = vpop.f32.mrb[0].mxu0
    %v1027 = vadd.f32 0.0, %v1026
    %v1028 = vpop.f32.mrb[0].mxu0
    %1029 = vdwg.mxu0
    %v1030 = vadd.f32 %v871, %v992
    %v1031 = vadd.f32 %v876, %v997
    %v1032 = vadd.f32 %v881, %v1002
    %v1033 = vadd.f32 %v886, %v1007
    %v1034 = vadd.f32 %v891, %v1012
    %v1035 = vadd.f32 %v896, %v1017
    %v1036 = vadd.f32 %v901, %v1022
    %v1037 = vadd.f32 %v906, %v1027
    %1038 = vst [vmem:[#allocation17] sm:$0xff] %v1030
    %1039 = vst [vmem:[#allocation17 + $0x8] sm:$0xff] %v1031
    %1040 = vst [vmem:[#allocation17 + $0x10] sm:$0xff] %v1032
    %1041 = vst [vmem:[#allocation17 + $0x18] sm:$0xff] %v1033
    %1042 = vst [vmem:[#allocation17 + $0x20] sm:$0xff] %v1034
    %1043 = vst [vmem:[#allocation17 + $0x28] sm:$0xff] %v1035
    %1044 = vst [vmem:[#allocation17 + $0x30] sm:$0xff] %v1036
    %1045 = vst [vmem:[#allocation17 + $0x38] sm:$0xff] %v1037
    // Predicated region
    $region54: #{tpu_custom_call.1} parent=1 // pred_check
      _
    $region55: #{tpu_custom_call.1} parent=1 // pred_check_branch
      %1047 = sbr.rel (0) target = $region57
    $region56: #{tpu_custom_call.1} parent=1 // pred_region
      %s1049 = ssub.s32 1024, 1024
      %1050 = vsyncadd [#allocation8], %s1049
      %s1051 = sshll.u32 [#allocation17], 4
      %s1052 = int_to_ptr.vmem [resolvable:$true] %s1051
      %1057 = dma.vmem_to_hbm [thread:$0]  %s1052, 1024, %s6, [#allocation8], 128, 128, 8
    $region57: #{tpu_custom_call.1} parent=1 // pred_fallthru
      _
    // Predicated region
    $region58: #{tpu_custom_call.1} parent=1 // pred_check
      _
    $region59: #{tpu_custom_call.1} parent=1 // pred_check_branch
      %1059 = sbr.rel (0) target = $region61
    $region60: #{tpu_custom_call.1} parent=1 // pred_region
      %1060 = dma.done [#allocation8], 1024
    $region61: #{tpu_custom_call.1} parent=1 // pred_fallthru
      _
    %1061 = vsyncpa [#allocation7], 1
    %1062 = vsyncpa [#allocation10], 1
    %1063 = vsyncpa [#allocation13], 1
    %1064 = vsyncpa [#allocation16], 1
    %1065 = vsyncpa [#allocation8], 1

</llo_original>
